<compile_context>
chip_gen: v7x
topology: tpu7x:2x2x1
jax: 0.10.0
libtpu: 0.0.40
codegen_flags: <defaults>
</compile_context>

<pallas_src>
import math

import jax
import jax.numpy as jnp
from jax.experimental import pallas as pl
from jax.experimental.pallas import tpu as pltpu

# --- Hyperparameters (small, consistent with the module's forward) ---
B = 2          # batch
SEQ_LEN = 8    # data_resolution_nth_note * data_length_bars
N_NOTE = 16    # data_note_high - data_note_low + 1
H_ENC = 32     # cmp_enc_rnn_hidden_size
Z = 8          # cmp_hidden_size
H_DEC = 32     # cmp_dec_rnn_hidden_size
N_OUT = B * SEQ_LEN   # decoder sequence length (= output rows)

# --- Packed-parameter layout (all weights stored pre-transposed, 8-row aligned) ---
_PACK_COLS = 32
_PACK_LAYOUT = [
    ("enc_w_ih_t", (N_NOTE, H_ENC)),   # enc_w_ih.T
    ("enc_w_hh_t", (H_ENC, H_ENC)),    # enc_w_hh.T
    ("enc_b",      (1, H_ENC)),        # b_ih + b_hh
    ("enc_fc_w_t", (H_ENC, Z)),        # enc_fc_w.T
    ("enc_fc_b",   (1, Z)),
    ("dec_w_ih_t", (Z, H_DEC)),        # dec_w_ih.T
    ("dec_w_hh_t", (H_DEC, H_DEC)),    # dec_w_hh.T
    ("dec_b",      (1, H_DEC)),        # b_ih + b_hh
    ("dec_fc_w_t", (H_DEC, N_NOTE)),   # dec_fc_w.T
    ("dec_fc_b",   (1, N_NOTE)),
]


def _rup8(n):
    return ((n + 7) // 8) * 8


_PACK_OFFSETS = {}
_off = 0
for _name, (_r, _c) in _PACK_LAYOUT:
    _PACK_OFFSETS[_name] = (_off, _r, _c)
    _off += _rup8(_r)
_PACK_ROWS = _off   # 184


def pack_params(p):
    """Pre-transpose and pack all parameters into one (184, 32) f32 buffer.

    Call ONCE at parameter-load time; the result is reused by every forward.
    """
    mats = {
        "enc_w_ih_t": p["enc_w_ih"].T,
        "enc_w_hh_t": p["enc_w_hh"].T,
        "enc_b":      p["enc_b"],
        "enc_fc_w_t": p["enc_fc_w"].T,
        "enc_fc_b":   p["enc_fc_b"],
        "dec_w_ih_t": p["dec_w_ih"].T,
        "dec_w_hh_t": p["dec_w_hh"].T,
        "dec_b":      p["dec_b"],
        "dec_fc_w_t": p["dec_fc_w"].T,
        "dec_fc_b":   p["dec_fc_b"],
    }
    pieces = []
    for name, (r, c) in _PACK_LAYOUT:
        a = mats[name].astype(jnp.float32)
        pieces.append(jnp.pad(a, ((0, _rup8(r) - r), (0, _PACK_COLS - c))))
    return jnp.concatenate(pieces, axis=0)        # (_PACK_ROWS, 32)


def autoencoder_kernel(x_ref, w_ref, out_ref):
    # x_ref:  (SEQ_LEN*B, N_NOTE) f32, time-major flattened: row t*B+b = x[b, t, :]
    # w_ref:  (_PACK_ROWS, 32) packed, pre-transposed parameters
    # out_ref:(B*SEQ_LEN, N_NOTE)

    def getp(name):
        off, r, c = _PACK_OFFSETS[name]          # all static Python ints
        return w_ref[pl.ds(off, r), pl.ds(0, c)]

    # ---------- Encoder RNN (Elman tanh) ----------
    # Input projection for ALL time steps hoisted into one matmul, fully off the
    # serial h-dependency chain.
    xproj_all = jnp.dot(x_ref[...], getp("enc_w_ih_t"),
                        preferred_element_type=jnp.float32) + getp("enc_b")
    e_whh_t = getp("enc_w_hh_t")                 # (H_ENC, H_ENC)

    h = jnp.zeros((B, H_ENC), jnp.float32)
    for t in range(SEQ_LEN):                     # fully unrolled (T = 8)
        xproj_t = xproj_all[t * B:(t + 1) * B, :]    # static (B, H_ENC) slice
        h = jnp.tanh(xproj_t + jnp.dot(h, e_whh_t,
                                       preferred_element_type=jnp.float32))

    # ---------- Encoder FC -> latent ----------
    z = jnp.dot(h, getp("enc_fc_w_t"),
                preferred_element_type=jnp.float32) + getp("enc_fc_b")   # (B, Z)

    # ---------- Decoder RNN ----------
    # torch repeat(1, S, 1) on 2-D (B, Z) -> single sequence of length B*S whose
    # step-t input is z[t mod B]; per-batch input projections hoisted.
    d_whh_t = getp("dec_w_hh_t")                 # (H_DEC, H_DEC)
    dproj = jnp.dot(z, getp("dec_w_ih_t"),
                    preferred_element_type=jnp.float32) + getp("dec_b")  # (B, H_DEC)
    d_rows = [dproj[i:i + 1, :] for i in range(B)]   # static row slices, hoisted

    hd = jnp.zeros((1, H_DEC), jnp.float32)
    hs_rows = []                                 # hidden states kept in vregs
    for t in range(N_OUT):                       # fully unrolled (N = 16)
        hd = jnp.tanh(d_rows[t % B] +
                      jnp.dot(hd, d_whh_t, preferred_element_type=jnp.float32))
        hs_rows.append(hd)
    hs = jnp.concatenate(hs_rows, axis=0)        # (N_OUT, H_DEC), no VMEM scratch

    # ---------- Decoder FC (single matmul, single dense store) ----------
    out = jnp.dot(hs, getp("dec_fc_w_t"),
                  preferred_element_type=jnp.float32) + getp("dec_fc_b")
    out_ref[...] = out.astype(out_ref.dtype)


@jax.jit
def autoencoder_forward(x_btc, packed_w):
    """x_btc: (B, SEQ_LEN, N_NOTE) piano-roll batch (PyTorch batch_first layout).
    packed_w: (_PACK_ROWS, 32) buffer from pack_params (packed once, reused)."""
    # batch_first -> time-major, flattened to 2-D so the kernel's encoder input
    # projection is one matmul over all steps.
    x2d = jnp.transpose(x_btc, (1, 0, 2)).reshape(SEQ_LEN * B, N_NOTE)
    x2d = x2d.astype(jnp.float32)

    vmem = pl.BlockSpec(memory_space=pltpu.MemorySpace.VMEM)
    return pl.pallas_call(
        autoencoder_kernel,
        out_shape=jax.ShapeDtypeStruct((N_OUT, N_NOTE), jnp.float32),
        in_specs=[vmem, vmem],
        out_specs=vmem,
    )(x2d, packed_w)


def init_params(key):
    """Deterministic synthetic parameters, PyTorch-style uniform init scales."""
    ks = jax.random.split(key, 10)
    u = lambda k, s, sc: jax.random.uniform(k, s, jnp.float32, -sc, sc)
    se = 1.0 / math.sqrt(H_ENC)
    sd = 1.0 / math.sqrt(H_DEC)
    return {
        # Encoder RNN (Elman tanh)
        "enc_w_ih": u(ks[0], (H_ENC, N_NOTE), se),
        "enc_w_hh": u(ks[1], (H_ENC, H_ENC), se),
        "enc_b":    u(ks[2], (1, H_ENC), se),          # b_ih + b_hh combined
        # Encoder Linear (H_ENC -> Z)
        "enc_fc_w": u(ks[3], (Z, H_ENC), se),
        "enc_fc_b": u(ks[4], (1, Z), se),
        # Decoder RNN (Elman tanh)
        "dec_w_ih": u(ks[5], (H_DEC, Z), sd),
        "dec_w_hh": u(ks[6], (H_DEC, H_DEC), sd),
        "dec_b":    u(ks[7], (1, H_DEC), sd),          # b_ih + b_hh combined
        # Decoder Linear (H_DEC -> N_NOTE)
        "dec_fc_w": u(ks[8], (N_NOTE, H_DEC), sd),
        "dec_fc_b": u(ks[9], (1, N_NOTE), sd),
    }


def reference_forward(x_btc, p):
    """Pure-JAX reference matching the PyTorch forward semantics."""
    Bn, T, _ = x_btc.shape
    x = x_btc.astype(jnp.float32)
    h = jnp.zeros((Bn, H_ENC), jnp.float32)
    for t in range(T):
        h = jnp.tanh(x[:, t, :] @ p["enc_w_ih"].T + p["enc_b"][0]
                     + h @ p["enc_w_hh"].T)
    z = h @ p["enc_fc_w"].T + p["enc_fc_b"][0]                      # (B, Z)
    # repeat(1, S, 1) on 2-D -> one sequence of length B*S
    N = Bn * SEQ_LEN
    hd = jnp.zeros((H_DEC,), jnp.float32)
    outs = []
    for t in range(N):
        xt = z[t % Bn]
        hd = jnp.tanh(xt @ p["dec_w_ih"].T + p["dec_b"][0]
                      + hd @ p["dec_w_hh"].T)
        outs.append(hd)
    hs = jnp.stack(outs)                                            # (B*S, H_DEC)
    return hs @ p["dec_fc_w"].T + p["dec_fc_b"][0]                  # (B*S, N_NOTE)


if __name__ == "__main__":
    key = jax.random.PRNGKey(0)
    k_x, k_p = jax.random.split(key)
    # Binary-ish piano roll input (B, SEQ_LEN, N_NOTE)
    prbt = (jax.random.uniform(k_x, (B, SEQ_LEN, N_NOTE)) > 0.7).astype(jnp.float32)
    params = init_params(k_p)

    # Pack parameters ONCE (parameter-load time), reuse across forwards.
    packed_w = jax.block_until_ready(pack_params(params))

    out = autoencoder_forward(prbt, packed_w)
    out = jax.block_until_ready(out)

    ref = reference_forward(prbt, params)
    assert out.shape == (B * SEQ_LEN, N_NOTE), out.shape
    assert jnp.allclose(out, ref, rtol=1e-4, atol=1e-4), \
        f"max abs err {jnp.max(jnp.abs(out - ref))}"
    print("KERNEL_OK")
</pallas_src>

<mosaic_0001>
module attributes {stable_mosaic.version = 11 : i64} {
  func.func @autoencoder_kernel(%arg0: memref<16x16xf32, #tpu.memory_space<vmem>>, %arg1: memref<184x32xf32, #tpu.memory_space<vmem>>, %arg2: memref<16x16xf32, #tpu.memory_space<vmem>>) attributes {dimension_semantics = [], scalar_prefetch = 0 : i64, scratch_operands = 0 : i64, tpu.core_type = #tpu.core_type<tc>} {
    %c0 = arith.constant 0 : index
    %c0_0 = arith.constant 0 : index
    %0 = vector.load %arg0[%c0, %c0_0] : memref<16x16xf32, #tpu.memory_space<vmem>>, vector<16x16xf32>
    %c0_1 = arith.constant 0 : index
    %c0_2 = arith.constant 0 : index
    %1 = vector.load %arg1[%c0_1, %c0_2] : memref<184x32xf32, #tpu.memory_space<vmem>>, vector<16x32xf32>
    %cst = arith.constant dense<0.000000e+00> : vector<16x32xf32>
    %2 = tpu.matmul %0, %1, %cst {dimension_numbers = #tpu.dot_dimension_numbers<[1], [0], [0], [1], [0, 0, 1, 1], [], []>} : vector<16x16xf32>, vector<16x32xf32>, vector<16x32xf32> -> vector<16x32xf32>
    %c48 = arith.constant 48 : index
    %c0_3 = arith.constant 0 : index
    %3 = vector.load %arg1[%c48, %c0_3] : memref<184x32xf32, #tpu.memory_space<vmem>>, vector<1x32xf32>
    %4 = vector.broadcast %3 : vector<1x32xf32> to vector<16x32xf32>
    %5 = arith.addf %2, %4 : vector<16x32xf32>
    %c16 = arith.constant 16 : index
    %c0_4 = arith.constant 0 : index
    %6 = vector.load %arg1[%c16, %c0_4] : memref<184x32xf32, #tpu.memory_space<vmem>>, vector<32x32xf32>
    %cst_5 = arith.constant 0.000000e+00 : f32
    %7 = vector.broadcast %cst_5 : f32 to vector<2x32xf32>
    %8 = vector.extract_strided_slice %5 {offsets = [0, 0], sizes = [2, 32], strides = [1, 1]} : vector<16x32xf32> to vector<2x32xf32>
    %cst_6 = arith.constant dense<0.000000e+00> : vector<2x32xf32>
    %9 = tpu.matmul %7, %6, %cst_6 {dimension_numbers = #tpu.dot_dimension_numbers<[1], [0], [0], [1], [0, 0, 1, 1], [], []>} : vector<2x32xf32>, vector<32x32xf32>, vector<2x32xf32> -> vector<2x32xf32>
    %10 = arith.addf %8, %9 : vector<2x32xf32>
    %11 = math.tanh %10 : vector<2x32xf32>
    %12 = vector.extract_strided_slice %5 {offsets = [2, 0], sizes = [2, 32], strides = [1, 1]} : vector<16x32xf32> to vector<2x32xf32>
    %cst_7 = arith.constant dense<0.000000e+00> : vector<2x32xf32>
    %13 = tpu.matmul %11, %6, %cst_7 {dimension_numbers = #tpu.dot_dimension_numbers<[1], [0], [0], [1], [0, 0, 1, 1], [], []>} : vector<2x32xf32>, vector<32x32xf32>, vector<2x32xf32> -> vector<2x32xf32>
    %14 = arith.addf %12, %13 : vector<2x32xf32>
    %15 = math.tanh %14 : vector<2x32xf32>
    %16 = vector.extract_strided_slice %5 {offsets = [4, 0], sizes = [2, 32], strides = [1, 1]} : vector<16x32xf32> to vector<2x32xf32>
    %cst_8 = arith.constant dense<0.000000e+00> : vector<2x32xf32>
    %17 = tpu.matmul %15, %6, %cst_8 {dimension_numbers = #tpu.dot_dimension_numbers<[1], [0], [0], [1], [0, 0, 1, 1], [], []>} : vector<2x32xf32>, vector<32x32xf32>, vector<2x32xf32> -> vector<2x32xf32>
    %18 = arith.addf %16, %17 : vector<2x32xf32>
    %19 = math.tanh %18 : vector<2x32xf32>
    %20 = vector.extract_strided_slice %5 {offsets = [6, 0], sizes = [2, 32], strides = [1, 1]} : vector<16x32xf32> to vector<2x32xf32>
    %cst_9 = arith.constant dense<0.000000e+00> : vector<2x32xf32>
    %21 = tpu.matmul %19, %6, %cst_9 {dimension_numbers = #tpu.dot_dimension_numbers<[1], [0], [0], [1], [0, 0, 1, 1], [], []>} : vector<2x32xf32>, vector<32x32xf32>, vector<2x32xf32> -> vector<2x32xf32>
    %22 = arith.addf %20, %21 : vector<2x32xf32>
    %23 = math.tanh %22 : vector<2x32xf32>
    %24 = vector.extract_strided_slice %5 {offsets = [8, 0], sizes = [2, 32], strides = [1, 1]} : vector<16x32xf32> to vector<2x32xf32>
    %cst_10 = arith.constant dense<0.000000e+00> : vector<2x32xf32>
    %25 = tpu.matmul %23, %6, %cst_10 {dimension_numbers = #tpu.dot_dimension_numbers<[1], [0], [0], [1], [0, 0, 1, 1], [], []>} : vector<2x32xf32>, vector<32x32xf32>, vector<2x32xf32> -> vector<2x32xf32>
    %26 = arith.addf %24, %25 : vector<2x32xf32>
    %27 = math.tanh %26 : vector<2x32xf32>
    %28 = vector.extract_strided_slice %5 {offsets = [10, 0], sizes = [2, 32], strides = [1, 1]} : vector<16x32xf32> to vector<2x32xf32>
    %cst_11 = arith.constant dense<0.000000e+00> : vector<2x32xf32>
    %29 = tpu.matmul %27, %6, %cst_11 {dimension_numbers = #tpu.dot_dimension_numbers<[1], [0], [0], [1], [0, 0, 1, 1], [], []>} : vector<2x32xf32>, vector<32x32xf32>, vector<2x32xf32> -> vector<2x32xf32>
    %30 = arith.addf %28, %29 : vector<2x32xf32>
    %31 = math.tanh %30 : vector<2x32xf32>
    %32 = vector.extract_strided_slice %5 {offsets = [12, 0], sizes = [2, 32], strides = [1, 1]} : vector<16x32xf32> to vector<2x32xf32>
    %cst_12 = arith.constant dense<0.000000e+00> : vector<2x32xf32>
    %33 = tpu.matmul %31, %6, %cst_12 {dimension_numbers = #tpu.dot_dimension_numbers<[1], [0], [0], [1], [0, 0, 1, 1], [], []>} : vector<2x32xf32>, vector<32x32xf32>, vector<2x32xf32> -> vector<2x32xf32>
    %34 = arith.addf %32, %33 : vector<2x32xf32>
    %35 = math.tanh %34 : vector<2x32xf32>
    %36 = vector.extract_strided_slice %5 {offsets = [14, 0], sizes = [2, 32], strides = [1, 1]} : vector<16x32xf32> to vector<2x32xf32>
    %cst_13 = arith.constant dense<0.000000e+00> : vector<2x32xf32>
    %37 = tpu.matmul %35, %6, %cst_13 {dimension_numbers = #tpu.dot_dimension_numbers<[1], [0], [0], [1], [0, 0, 1, 1], [], []>} : vector<2x32xf32>, vector<32x32xf32>, vector<2x32xf32> -> vector<2x32xf32>
    %38 = arith.addf %36, %37 : vector<2x32xf32>
    %39 = math.tanh %38 : vector<2x32xf32>
    %c56 = arith.constant 56 : index
    %c0_14 = arith.constant 0 : index
    %40 = vector.load %arg1[%c56, %c0_14] : memref<184x32xf32, #tpu.memory_space<vmem>>, vector<32x8xf32>
    %cst_15 = arith.constant dense<0.000000e+00> : vector<2x8xf32>
    %41 = tpu.matmul %39, %40, %cst_15 {dimension_numbers = #tpu.dot_dimension_numbers<[1], [0], [0], [1], [0, 0, 1, 1], [], []>} : vector<2x32xf32>, vector<32x8xf32>, vector<2x8xf32> -> vector<2x8xf32>
    %c88 = arith.constant 88 : index
    %c0_16 = arith.constant 0 : index
    %42 = vector.load %arg1[%c88, %c0_16] : memref<184x32xf32, #tpu.memory_space<vmem>>, vector<1x8xf32>
    %43 = vector.broadcast %42 : vector<1x8xf32> to vector<2x8xf32>
    %44 = arith.addf %41, %43 : vector<2x8xf32>
    %c104 = arith.constant 104 : index
    %c0_17 = arith.constant 0 : index
    %45 = vector.load %arg1[%c104, %c0_17] : memref<184x32xf32, #tpu.memory_space<vmem>>, vector<32x32xf32>
    %c96 = arith.constant 96 : index
    %c0_18 = arith.constant 0 : index
    %46 = vector.load %arg1[%c96, %c0_18] : memref<184x32xf32, #tpu.memory_space<vmem>>, vector<8x32xf32>
    %cst_19 = arith.constant dense<0.000000e+00> : vector<2x32xf32>
    %47 = tpu.matmul %44, %46, %cst_19 {dimension_numbers = #tpu.dot_dimension_numbers<[1], [0], [0], [1], [0, 0, 1, 1], [], []>} : vector<2x8xf32>, vector<8x32xf32>, vector<2x32xf32> -> vector<2x32xf32>
    %c136 = arith.constant 136 : index
    %c0_20 = arith.constant 0 : index
    %48 = vector.load %arg1[%c136, %c0_20] : memref<184x32xf32, #tpu.memory_space<vmem>>, vector<1x32xf32>
    %49 = vector.broadcast %48 : vector<1x32xf32> to vector<2x32xf32>
    %50 = arith.addf %47, %49 : vector<2x32xf32>
    %51 = vector.extract_strided_slice %50 {offsets = [0, 0], sizes = [1, 32], strides = [1, 1]} : vector<2x32xf32> to vector<1x32xf32>
    %52 = vector.extract_strided_slice %50 {offsets = [1, 0], sizes = [1, 32], strides = [1, 1]} : vector<2x32xf32> to vector<1x32xf32>
    %cst_21 = arith.constant 0.000000e+00 : f32
    %53 = vector.broadcast %cst_21 : f32 to vector<1x32xf32>
    %cst_22 = arith.constant dense<0.000000e+00> : vector<1x32xf32>
    %54 = tpu.matmul %53, %45, %cst_22 {dimension_numbers = #tpu.dot_dimension_numbers<[1], [0], [0], [1], [0, 0, 1, 1], [], []>} : vector<1x32xf32>, vector<32x32xf32>, vector<1x32xf32> -> vector<1x32xf32>
    %55 = arith.addf %51, %54 : vector<1x32xf32>
    %56 = math.tanh %55 : vector<1x32xf32>
    %cst_23 = arith.constant dense<0.000000e+00> : vector<1x32xf32>
    %57 = tpu.matmul %56, %45, %cst_23 {dimension_numbers = #tpu.dot_dimension_numbers<[1], [0], [0], [1], [0, 0, 1, 1], [], []>} : vector<1x32xf32>, vector<32x32xf32>, vector<1x32xf32> -> vector<1x32xf32>
    %58 = arith.addf %52, %57 : vector<1x32xf32>
    %59 = math.tanh %58 : vector<1x32xf32>
    %cst_24 = arith.constant dense<0.000000e+00> : vector<1x32xf32>
    %60 = tpu.matmul %59, %45, %cst_24 {dimension_numbers = #tpu.dot_dimension_numbers<[1], [0], [0], [1], [0, 0, 1, 1], [], []>} : vector<1x32xf32>, vector<32x32xf32>, vector<1x32xf32> -> vector<1x32xf32>
    %61 = arith.addf %51, %60 : vector<1x32xf32>
    %62 = math.tanh %61 : vector<1x32xf32>
    %cst_25 = arith.constant dense<0.000000e+00> : vector<1x32xf32>
    %63 = tpu.matmul %62, %45, %cst_25 {dimension_numbers = #tpu.dot_dimension_numbers<[1], [0], [0], [1], [0, 0, 1, 1], [], []>} : vector<1x32xf32>, vector<32x32xf32>, vector<1x32xf32> -> vector<1x32xf32>
    %64 = arith.addf %52, %63 : vector<1x32xf32>
    %65 = math.tanh %64 : vector<1x32xf32>
    %cst_26 = arith.constant dense<0.000000e+00> : vector<1x32xf32>
    %66 = tpu.matmul %65, %45, %cst_26 {dimension_numbers = #tpu.dot_dimension_numbers<[1], [0], [0], [1], [0, 0, 1, 1], [], []>} : vector<1x32xf32>, vector<32x32xf32>, vector<1x32xf32> -> vector<1x32xf32>
    %67 = arith.addf %51, %66 : vector<1x32xf32>
    %68 = math.tanh %67 : vector<1x32xf32>
    %cst_27 = arith.constant dense<0.000000e+00> : vector<1x32xf32>
    %69 = tpu.matmul %68, %45, %cst_27 {dimension_numbers = #tpu.dot_dimension_numbers<[1], [0], [0], [1], [0, 0, 1, 1], [], []>} : vector<1x32xf32>, vector<32x32xf32>, vector<1x32xf32> -> vector<1x32xf32>
    %70 = arith.addf %52, %69 : vector<1x32xf32>
    %71 = math.tanh %70 : vector<1x32xf32>
    %cst_28 = arith.constant dense<0.000000e+00> : vector<1x32xf32>
    %72 = tpu.matmul %71, %45, %cst_28 {dimension_numbers = #tpu.dot_dimension_numbers<[1], [0], [0], [1], [0, 0, 1, 1], [], []>} : vector<1x32xf32>, vector<32x32xf32>, vector<1x32xf32> -> vector<1x32xf32>
    %73 = arith.addf %51, %72 : vector<1x32xf32>
    %74 = math.tanh %73 : vector<1x32xf32>
    %cst_29 = arith.constant dense<0.000000e+00> : vector<1x32xf32>
    %75 = tpu.matmul %74, %45, %cst_29 {dimension_numbers = #tpu.dot_dimension_numbers<[1], [0], [0], [1], [0, 0, 1, 1], [], []>} : vector<1x32xf32>, vector<32x32xf32>, vector<1x32xf32> -> vector<1x32xf32>
    %76 = arith.addf %52, %75 : vector<1x32xf32>
    %77 = math.tanh %76 : vector<1x32xf32>
    %cst_30 = arith.constant dense<0.000000e+00> : vector<1x32xf32>
    %78 = tpu.matmul %77, %45, %cst_30 {dimension_numbers = #tpu.dot_dimension_numbers<[1], [0], [0], [1], [0, 0, 1, 1], [], []>} : vector<1x32xf32>, vector<32x32xf32>, vector<1x32xf32> -> vector<1x32xf32>
    %79 = arith.addf %51, %78 : vector<1x32xf32>
    %80 = math.tanh %79 : vector<1x32xf32>
    %cst_31 = arith.constant dense<0.000000e+00> : vector<1x32xf32>
    %81 = tpu.matmul %80, %45, %cst_31 {dimension_numbers = #tpu.dot_dimension_numbers<[1], [0], [0], [1], [0, 0, 1, 1], [], []>} : vector<1x32xf32>, vector<32x32xf32>, vector<1x32xf32> -> vector<1x32xf32>
    %82 = arith.addf %52, %81 : vector<1x32xf32>
    %83 = math.tanh %82 : vector<1x32xf32>
    %cst_32 = arith.constant dense<0.000000e+00> : vector<1x32xf32>
    %84 = tpu.matmul %83, %45, %cst_32 {dimension_numbers = #tpu.dot_dimension_numbers<[1], [0], [0], [1], [0, 0, 1, 1], [], []>} : vector<1x32xf32>, vector<32x32xf32>, vector<1x32xf32> -> vector<1x32xf32>
    %85 = arith.addf %51, %84 : vector<1x32xf32>
    %86 = math.tanh %85 : vector<1x32xf32>
    %cst_33 = arith.constant dense<0.000000e+00> : vector<1x32xf32>
    %87 = tpu.matmul %86, %45, %cst_33 {dimension_numbers = #tpu.dot_dimension_numbers<[1], [0], [0], [1], [0, 0, 1, 1], [], []>} : vector<1x32xf32>, vector<32x32xf32>, vector<1x32xf32> -> vector<1x32xf32>
    %88 = arith.addf %52, %87 : vector<1x32xf32>
    %89 = math.tanh %88 : vector<1x32xf32>
    %cst_34 = arith.constant dense<0.000000e+00> : vector<1x32xf32>
    %90 = tpu.matmul %89, %45, %cst_34 {dimension_numbers = #tpu.dot_dimension_numbers<[1], [0], [0], [1], [0, 0, 1, 1], [], []>} : vector<1x32xf32>, vector<32x32xf32>, vector<1x32xf32> -> vector<1x32xf32>
    %91 = arith.addf %51, %90 : vector<1x32xf32>
    %92 = math.tanh %91 : vector<1x32xf32>
    %cst_35 = arith.constant dense<0.000000e+00> : vector<1x32xf32>
    %93 = tpu.matmul %92, %45, %cst_35 {dimension_numbers = #tpu.dot_dimension_numbers<[1], [0], [0], [1], [0, 0, 1, 1], [], []>} : vector<1x32xf32>, vector<32x32xf32>, vector<1x32xf32> -> vector<1x32xf32>
    %94 = arith.addf %52, %93 : vector<1x32xf32>
    %95 = math.tanh %94 : vector<1x32xf32>
    %cst_36 = arith.constant dense<0.000000e+00> : vector<1x32xf32>
    %96 = tpu.matmul %95, %45, %cst_36 {dimension_numbers = #tpu.dot_dimension_numbers<[1], [0], [0], [1], [0, 0, 1, 1], [], []>} : vector<1x32xf32>, vector<32x32xf32>, vector<1x32xf32> -> vector<1x32xf32>
    %97 = arith.addf %51, %96 : vector<1x32xf32>
    %98 = math.tanh %97 : vector<1x32xf32>
    %cst_37 = arith.constant dense<0.000000e+00> : vector<1x32xf32>
    %99 = tpu.matmul %98, %45, %cst_37 {dimension_numbers = #tpu.dot_dimension_numbers<[1], [0], [0], [1], [0, 0, 1, 1], [], []>} : vector<1x32xf32>, vector<32x32xf32>, vector<1x32xf32> -> vector<1x32xf32>
    %100 = arith.addf %52, %99 : vector<1x32xf32>
    %101 = math.tanh %100 : vector<1x32xf32>
    %102 = tpu.concatenate %56, %59, %62, %65, %68, %71, %74, %77, %80, %83, %86, %89, %92, %95, %98, %101 in 0 : vector<1x32xf32>, vector<1x32xf32>, vector<1x32xf32>, vector<1x32xf32>, vector<1x32xf32>, vector<1x32xf32>, vector<1x32xf32>, vector<1x32xf32>, vector<1x32xf32>, vector<1x32xf32>, vector<1x32xf32>, vector<1x32xf32>, vector<1x32xf32>, vector<1x32xf32>, vector<1x32xf32>, vector<1x32xf32> -> vector<16x32xf32>
    %c144 = arith.constant 144 : index
    %c0_38 = arith.constant 0 : index
    %103 = vector.load %arg1[%c144, %c0_38] : memref<184x32xf32, #tpu.memory_space<vmem>>, vector<32x16xf32>
    %cst_39 = arith.constant dense<0.000000e+00> : vector<16x16xf32>
    %104 = tpu.matmul %102, %103, %cst_39 {dimension_numbers = #tpu.dot_dimension_numbers<[1], [0], [0], [1], [0, 0, 1, 1], [], []>} : vector<16x32xf32>, vector<32x16xf32>, vector<16x16xf32> -> vector<16x16xf32>
    %c176 = arith.constant 176 : index
    %c0_40 = arith.constant 0 : index
    %105 = vector.load %arg1[%c176, %c0_40] : memref<184x32xf32, #tpu.memory_space<vmem>>, vector<1x16xf32>
    %106 = vector.broadcast %105 : vector<1x16xf32> to vector<16x16xf32>
    %107 = arith.addf %104, %106 : vector<16x16xf32>
    %c0_41 = arith.constant 0 : index
    %c0_42 = arith.constant 0 : index
    %108 = vector.load %arg2[%c0_41, %c0_42] : memref<16x16xf32, #tpu.memory_space<vmem>>, vector<16x16xf32>
    tpu.vector_store %arg2[%c0_41, %c0_42], %107 {strides = array<i32>} : memref<16x16xf32, #tpu.memory_space<vmem>>, vector<16x16xf32>,
    return
  }
}

</mosaic_0001>

<llo_original>
// kernel: autoencoder_forward.1
$region0: #{autoencoder_forward.1}
  #allocation0 [shape = 'u32[]', space=smem, size = 0x4, offset = 0x4, fixed_abs, tag = 'smem constant byte address 0x4 - core index']
  #allocation1 [shape = 'u32[144,128]{1,0:T(1,128)}', space=vmem, size = 0x12000, scoped, tag = 'internal scratch']
  %s0 = inlined_call_operand.vmem [shape: f32[16,16], index: 0, kind: input, shape index: {}]
  %s1 = inlined_call_operand.vmem [shape: f32[184,32], index: 1, kind: input, shape index: {}]
  %s2 = inlined_call_operand.hbm [shape: f32[16,16], index: 2, kind: output, shape index: {}]
  %s3 = sld [smem:[#allocation0]]
  $region18: #{autoencoder_forward.1} parent=0
    _
  %s5 = ssub.s32 1, %s3
  %s6 = scalar_select 0, %s5, %s3
  $region1: #{autoencoder_forward.1} parent=0
    #allocation2 [shape = 'u8[8192]{0}', space=vmem, size = 0x2000, scoped, tag = 'output window, operand 0, single buffered']
    #allocation3 [shape = 's32[1]{0}', space=sflag, size = 0x4, scoped, tag = 'scoped memory for autoencoder_forward.1']
    %7 = vsyncpa [#allocation3], 0
    // Predicated region
    $region2: #{autoencoder_forward.1} parent=1 // pred_check
      _
    $region3: #{autoencoder_forward.1} parent=1 // pred_check_branch
      %9 = sbr.rel (0) target = $region5
    $region4: #{autoencoder_forward.1} parent=1 // pred_region
      _
    $region5: #{autoencoder_forward.1} parent=1 // pred_fallthru
      _
    // Predicated region
    $region6: #{autoencoder_forward.1} parent=1 // pred_check
      _
    $region7: #{autoencoder_forward.1} parent=1 // pred_check_branch
      %11 = sbr.rel (0) target = $region9
    $region8: #{autoencoder_forward.1} parent=1 // pred_region
      _
    $region9: #{autoencoder_forward.1} parent=1 // pred_fallthru
      _
    %v12 = vld [vmem:[%s0] sm:$0xff]
    %v13 = vld [vmem:[%s0 + $0x8] sm:$0xff]
    %v14 = vld [vmem:[%s1] sm:$0xff]
    %v15 = vld [vmem:[%s1 + $0x8] sm:$0xff]
    %v16 = vld [vmem:[%s1 + $0x30] sm:$0x1]
    %v17 = vlaneseq
    %v18 = vshrl.u32 %v17, 7
    %v19 = vsub.s32 0, %v18
    %v20 = vrot.slane %v16, %v19
    %vm21 = vcmask 130048
    %v23 = vsel %vm21, %v12, 0
    %v26 = vsel %vm21, %v13, 0
    %28 = vmatprep.subr.mxu0 0.0
    %29 = vmatpush1.msra.mxu0 %v14
    %30 = vmatprep.subr.mxu0 0.0
    %31 = vmatpush1.msra.mxu0 %v15
    %32 = vmatprep.subr.mxu0 0.0
    %33 = vmatpush1.msra.mxu0 0.0
    %34 = vmatprep.subr.mxu0 0.0
    %35 = vmatpush1.msra.mxu0 0.0
    %36 = vmatprep.subr.mxu0 0.0
    %37 = vmatpush1.msra.mxu0 0.0
    %38 = vmatprep.subr.mxu0 0.0
    %39 = vmatpush1.msra.mxu0 0.0
    %40 = vmatprep.subr.mxu0 0.0
    %41 = vmatpush1.msra.mxu0 0.0
    %42 = vmatprep.subr.mxu0 0.0
    %43 = vmatpush1.msra.mxu0 0.0
    %44 = vmatprep.subr.mxu0 0.0
    %45 = vmatpush1.msra.mxu0 0.0
    %46 = vmatprep.subr.mxu0 0.0
    %47 = vmatpush1.msra.mxu0 0.0
    %48 = vmatprep.subr.mxu0 0.0
    %49 = vmatpush1.msra.mxu0 0.0
    %50 = vmatprep.subr.mxu0 0.0
    %51 = vmatpush1.msra.mxu0 0.0
    %52 = vmatprep.subr.mxu0 0.0
    %53 = vmatpush1.msra.mxu0 0.0
    %54 = vmatprep.subr.mxu0 0.0
    %55 = vmatpush1.msra.mxu0 0.0
    %56 = vmatprep.subr.mxu0 0.0
    %57 = vmatpush1.msra.mxu0 0.0
    %58 = vmatprep.subr.mxu0 0.0
    %59 = vmatpush1.msra.mxu0 0.0
    %60 = vmatprep.subr.mxu0 0.0
    %61 = vmatpush1.msra.mxu0 0.0
    %62 = vmatprep.subr.mxu0 0.0
    %63 = vmatpush1.msra.mxu0 0.0
    %64 = vmatprep.subr.mxu0 0.0
    %65 = vmatpush1.msra.mxu0 0.0
    %66 = vmatprep.subr.mxu0 0.0
    %67 = vmatpush1.msra.mxu0 0.0
    %68 = vmatprep.subr.mxu0 0.0
    %69 = vmatpush1.msra.mxu0 0.0
    %70 = vmatprep.subr.mxu0 0.0
    %71 = vmatpush1.msra.mxu0 0.0
    %72 = vmatprep.subr.mxu0 0.0
    %73 = vmatpush1.msra.mxu0 0.0
    %74 = vmatprep.subr.mxu0 0.0
    %75 = vmatpush1.msra.mxu0 0.0
    %76 = vmatprep.subr.mxu0 0.0
    %77 = vmatpush1.msra.mxu0 0.0
    %78 = vmatprep.subr.mxu0 0.0
    %79 = vmatpush1.msra.mxu0 0.0
    %80 = vmatprep.subr.mxu0 0.0
    %81 = vmatpush1.msra.mxu0 0.0
    %82 = vmatprep.subr.mxu0 0.0
    %83 = vmatpush1.msra.mxu0 0.0
    %84 = vmatprep.subr.mxu0 0.0
    %85 = vmatpush1.msra.mxu0 0.0
    %86 = vmatprep.subr.mxu0 0.0
    %87 = vmatpush1.msra.mxu0 0.0
    %88 = vmatprep.subr.mxu0 0.0
    %89 = vmatpush1.msra.mxu0 0.0
    %90 = vmatprep.subr.mxu0 0.0
    %91 = vmatpush1.msra.mxu0 0.0
    %92 = vmatprep.mubr.f32.mxu0 0.0
    %93 = vmatmul.mubr.f32.gmra.mrb[0].mxu0 %v23
    %v94 = vpop.f32.mrb[0].mxu0
    %v95 = vadd.f32 %v20, %v94
    %v96 = vpop.f32.mrb[0].mxu0
    %97 = vmatprep.mubr.f32.mxu0 0.0
    %98 = vmatmul.mubr.f32.gmra.mrb[0].mxu0 %v26
    %v99 = vpop.f32.mrb[0].mxu0
    %v100 = vadd.f32 %v20, %v99
    %v101 = vpop.f32.mrb[0].mxu0
    %102 = vdwg.mxu0
    %v103 = vld [vmem:[%s1 + $0x10] sm:$0xff]
    %v104 = vld [vmem:[%s1 + $0x18] sm:$0xff]
    %v105 = vld [vmem:[%s1 + $0x20] sm:$0xff]
    %v106 = vld [vmem:[%s1 + $0x28] sm:$0xff]
    %vm107 = vcmask 261120
    %v109 = vsel %vm107, 0.0, 0
    %111 = vmatprep.subr.mxu0 0.0
    %112 = vmatpush1.msra.mxu0 %v103
    %113 = vmatprep.subr.mxu0 0.0
    %114 = vmatpush1.msra.mxu0 %v104
    %115 = vmatprep.subr.mxu0 0.0
    %116 = vmatpush1.msra.mxu0 %v105
    %117 = vmatprep.subr.mxu0 0.0
    %118 = vmatpush1.msra.mxu0 %v106
    %119 = vmatprep.subr.mxu0 0.0
    %120 = vmatpush1.msra.mxu0 0.0
    %121 = vmatprep.subr.mxu0 0.0
    %122 = vmatpush1.msra.mxu0 0.0
    %123 = vmatprep.subr.mxu0 0.0
    %124 = vmatpush1.msra.mxu0 0.0
    %125 = vmatprep.subr.mxu0 0.0
    %126 = vmatpush1.msra.mxu0 0.0
    %127 = vmatprep.subr.mxu0 0.0
    %128 = vmatpush1.msra.mxu0 0.0
    %129 = vmatprep.subr.mxu0 0.0
    %130 = vmatpush1.msra.mxu0 0.0
    %131 = vmatprep.subr.mxu0 0.0
    %132 = vmatpush1.msra.mxu0 0.0
    %133 = vmatprep.subr.mxu0 0.0
    %134 = vmatpush1.msra.mxu0 0.0
    %135 = vmatprep.subr.mxu0 0.0
    %136 = vmatpush1.msra.mxu0 0.0
    %137 = vmatprep.subr.mxu0 0.0
    %138 = vmatpush1.msra.mxu0 0.0
    %139 = vmatprep.subr.mxu0 0.0
    %140 = vmatpush1.msra.mxu0 0.0
    %141 = vmatprep.subr.mxu0 0.0
    %142 = vmatpush1.msra.mxu0 0.0
    %143 = vmatprep.subr.mxu0 0.0
    %144 = vmatpush1.msra.mxu0 0.0
    %145 = vmatprep.subr.mxu0 0.0
    %146 = vmatpush1.msra.mxu0 0.0
    %147 = vmatprep.subr.mxu0 0.0
    %148 = vmatpush1.msra.mxu0 0.0
    %149 = vmatprep.subr.mxu0 0.0
    %150 = vmatpush1.msra.mxu0 0.0
    %151 = vmatprep.subr.mxu0 0.0
    %152 = vmatpush1.msra.mxu0 0.0
    %153 = vmatprep.subr.mxu0 0.0
    %154 = vmatpush1.msra.mxu0 0.0
    %155 = vmatprep.subr.mxu0 0.0
    %156 = vmatpush1.msra.mxu0 0.0
    %157 = vmatprep.subr.mxu0 0.0
    %158 = vmatpush1.msra.mxu0 0.0
    %159 = vmatprep.subr.mxu0 0.0
    %160 = vmatpush1.msra.mxu0 0.0
    %161 = vmatprep.subr.mxu0 0.0
    %162 = vmatpush1.msra.mxu0 0.0
    %163 = vmatprep.subr.mxu0 0.0
    %164 = vmatpush1.msra.mxu0 0.0
    %165 = vmatprep.subr.mxu0 0.0
    %166 = vmatpush1.msra.mxu0 0.0
    %167 = vmatprep.subr.mxu0 0.0
    %168 = vmatpush1.msra.mxu0 0.0
    %169 = vmatprep.subr.mxu0 0.0
    %170 = vmatpush1.msra.mxu0 0.0
    %171 = vmatprep.subr.mxu0 0.0
    %172 = vmatpush1.msra.mxu0 0.0
    %173 = vmatprep.subr.mxu0 0.0
    %174 = vmatpush1.msra.mxu0 0.0
    %175 = vmatprep.mubr.f32.mxu0 0.0
    %176 = vmatmul.mubr.f32.gmra.mrb[0].mxu0 %v109
    %v177 = vpop.f32.mrb[0].mxu0
    %v178 = vadd.f32 0.0, %v177
    %v179 = vpop.f32.mrb[0].mxu0
    %180 = vdwg.mxu0
    %v181 = vadd.f32 %v95, %v178
    %v182 = vtanh.pop %v181
    %v184 = vsel %vm107, %v182, 0
    %186 = vmatprep.subr.mxu0 0.0
    %187 = vmatpush1.msra.mxu0 %v103
    %188 = vmatprep.subr.mxu0 0.0
    %189 = vmatpush1.msra.mxu0 %v104
    %190 = vmatprep.subr.mxu0 0.0
    %191 = vmatpush1.msra.mxu0 %v105
    %192 = vmatprep.subr.mxu0 0.0
    %193 = vmatpush1.msra.mxu0 %v106
    %194 = vmatprep.subr.mxu0 0.0
    %195 = vmatpush1.msra.mxu0 0.0
    %196 = vmatprep.subr.mxu0 0.0
    %197 = vmatpush1.msra.mxu0 0.0
    %198 = vmatprep.subr.mxu0 0.0
    %199 = vmatpush1.msra.mxu0 0.0
    %200 = vmatprep.subr.mxu0 0.0
    %201 = vmatpush1.msra.mxu0 0.0
    %202 = vmatprep.subr.mxu0 0.0
    %203 = vmatpush1.msra.mxu0 0.0
    %204 = vmatprep.subr.mxu0 0.0
    %205 = vmatpush1.msra.mxu0 0.0
    %206 = vmatprep.subr.mxu0 0.0
    %207 = vmatpush1.msra.mxu0 0.0
    %208 = vmatprep.subr.mxu0 0.0
    %209 = vmatpush1.msra.mxu0 0.0
    %210 = vmatprep.subr.mxu0 0.0
    %211 = vmatpush1.msra.mxu0 0.0
    %212 = vmatprep.subr.mxu0 0.0
    %213 = vmatpush1.msra.mxu0 0.0
    %214 = vmatprep.subr.mxu0 0.0
    %215 = vmatpush1.msra.mxu0 0.0
    %216 = vmatprep.subr.mxu0 0.0
    %217 = vmatpush1.msra.mxu0 0.0
    %218 = vmatprep.subr.mxu0 0.0
    %219 = vmatpush1.msra.mxu0 0.0
    %220 = vmatprep.subr.mxu0 0.0
    %221 = vmatpush1.msra.mxu0 0.0
    %222 = vmatprep.subr.mxu0 0.0
    %223 = vmatpush1.msra.mxu0 0.0
    %224 = vmatprep.subr.mxu0 0.0
    %225 = vmatpush1.msra.mxu0 0.0
    %226 = vmatprep.subr.mxu0 0.0
    %227 = vmatpush1.msra.mxu0 0.0
    %228 = vmatprep.subr.mxu0 0.0
    %229 = vmatpush1.msra.mxu0 0.0
    %230 = vmatprep.subr.mxu0 0.0
    %231 = vmatpush1.msra.mxu0 0.0
    %232 = vmatprep.subr.mxu0 0.0
    %233 = vmatpush1.msra.mxu0 0.0
    %234 = vmatprep.subr.mxu0 0.0
    %235 = vmatpush1.msra.mxu0 0.0
    %236 = vmatprep.subr.mxu0 0.0
    %237 = vmatpush1.msra.mxu0 0.0
    %238 = vmatprep.subr.mxu0 0.0
    %239 = vmatpush1.msra.mxu0 0.0
    %240 = vmatprep.subr.mxu0 0.0
    %241 = vmatpush1.msra.mxu0 0.0
    %242 = vmatprep.subr.mxu0 0.0
    %243 = vmatpush1.msra.mxu0 0.0
    %244 = vmatprep.subr.mxu0 0.0
    %245 = vmatpush1.msra.mxu0 0.0
    %246 = vmatprep.subr.mxu0 0.0
    %247 = vmatpush1.msra.mxu0 0.0
    %248 = vmatprep.subr.mxu0 0.0
    %249 = vmatpush1.msra.mxu0 0.0
    %250 = vmatprep.mubr.f32.mxu0 0.0
    %251 = vmatmul.mubr.f32.gmra.mrb[0].mxu0 %v184
    %v252 = vpop.f32.mrb[0].mxu0
    %v253 = vadd.f32 0.0, %v252
    %v254 = vpop.f32.mrb[0].mxu0
    %255 = vdwg.mxu0
    %v257 = vrot.slane %v253, 6
    %v259 = vadd.f32 %v95, %v257
    %v260 = vtanh.pop %v259
    %v262 = vrot.slane %v260, 2
    %v263 = vsel %vm107, %v262, 0
    %265 = vmatprep.subr.mxu0 0.0
    %266 = vmatpush1.msra.mxu0 %v103
    %267 = vmatprep.subr.mxu0 0.0
    %268 = vmatpush1.msra.mxu0 %v104
    %269 = vmatprep.subr.mxu0 0.0
    %270 = vmatpush1.msra.mxu0 %v105
    %271 = vmatprep.subr.mxu0 0.0
    %272 = vmatpush1.msra.mxu0 %v106
    %273 = vmatprep.subr.mxu0 0.0
    %274 = vmatpush1.msra.mxu0 0.0
    %275 = vmatprep.subr.mxu0 0.0
    %276 = vmatpush1.msra.mxu0 0.0
    %277 = vmatprep.subr.mxu0 0.0
    %278 = vmatpush1.msra.mxu0 0.0
    %279 = vmatprep.subr.mxu0 0.0
    %280 = vmatpush1.msra.mxu0 0.0
    %281 = vmatprep.subr.mxu0 0.0
    %282 = vmatpush1.msra.mxu0 0.0
    %283 = vmatprep.subr.mxu0 0.0
    %284 = vmatpush1.msra.mxu0 0.0
    %285 = vmatprep.subr.mxu0 0.0
    %286 = vmatpush1.msra.mxu0 0.0
    %287 = vmatprep.subr.mxu0 0.0
    %288 = vmatpush1.msra.mxu0 0.0
    %289 = vmatprep.subr.mxu0 0.0
    %290 = vmatpush1.msra.mxu0 0.0
    %291 = vmatprep.subr.mxu0 0.0
    %292 = vmatpush1.msra.mxu0 0.0
    %293 = vmatprep.subr.mxu0 0.0
    %294 = vmatpush1.msra.mxu0 0.0
    %295 = vmatprep.subr.mxu0 0.0
    %296 = vmatpush1.msra.mxu0 0.0
    %297 = vmatprep.subr.mxu0 0.0
    %298 = vmatpush1.msra.mxu0 0.0
    %299 = vmatprep.subr.mxu0 0.0
    %300 = vmatpush1.msra.mxu0 0.0
    %301 = vmatprep.subr.mxu0 0.0
    %302 = vmatpush1.msra.mxu0 0.0
    %303 = vmatprep.subr.mxu0 0.0
    %304 = vmatpush1.msra.mxu0 0.0
    %305 = vmatprep.subr.mxu0 0.0
    %306 = vmatpush1.msra.mxu0 0.0
    %307 = vmatprep.subr.mxu0 0.0
    %308 = vmatpush1.msra.mxu0 0.0
    %309 = vmatprep.subr.mxu0 0.0
    %310 = vmatpush1.msra.mxu0 0.0
    %311 = vmatprep.subr.mxu0 0.0
    %312 = vmatpush1.msra.mxu0 0.0
    %313 = vmatprep.subr.mxu0 0.0
    %314 = vmatpush1.msra.mxu0 0.0
    %315 = vmatprep.subr.mxu0 0.0
    %316 = vmatpush1.msra.mxu0 0.0
    %317 = vmatprep.subr.mxu0 0.0
    %318 = vmatpush1.msra.mxu0 0.0
    %319 = vmatprep.subr.mxu0 0.0
    %320 = vmatpush1.msra.mxu0 0.0
    %321 = vmatprep.subr.mxu0 0.0
    %322 = vmatpush1.msra.mxu0 0.0
    %323 = vmatprep.subr.mxu0 0.0
    %324 = vmatpush1.msra.mxu0 0.0
    %325 = vmatprep.subr.mxu0 0.0
    %326 = vmatpush1.msra.mxu0 0.0
    %327 = vmatprep.subr.mxu0 0.0
    %328 = vmatpush1.msra.mxu0 0.0
    %329 = vmatprep.mubr.f32.mxu0 0.0
    %330 = vmatmul.mubr.f32.gmra.mrb[0].mxu0 %v263
    %v331 = vpop.f32.mrb[0].mxu0
    %v332 = vadd.f32 0.0, %v331
    %v333 = vpop.f32.mrb[0].mxu0
    %334 = vdwg.mxu0
    %v336 = vrot.slane %v332, 4
    %v338 = vadd.f32 %v95, %v336
    %v339 = vtanh.pop %v338
    %v341 = vrot.slane %v339, 4
    %v342 = vsel %vm107, %v341, 0
    %344 = vmatprep.subr.mxu0 0.0
    %345 = vmatpush1.msra.mxu0 %v103
    %346 = vmatprep.subr.mxu0 0.0
    %347 = vmatpush1.msra.mxu0 %v104
    %348 = vmatprep.subr.mxu0 0.0
    %349 = vmatpush1.msra.mxu0 %v105
    %350 = vmatprep.subr.mxu0 0.0
    %351 = vmatpush1.msra.mxu0 %v106
    %352 = vmatprep.subr.mxu0 0.0
    %353 = vmatpush1.msra.mxu0 0.0
    %354 = vmatprep.subr.mxu0 0.0
    %355 = vmatpush1.msra.mxu0 0.0
    %356 = vmatprep.subr.mxu0 0.0
    %357 = vmatpush1.msra.mxu0 0.0
    %358 = vmatprep.subr.mxu0 0.0
    %359 = vmatpush1.msra.mxu0 0.0
    %360 = vmatprep.subr.mxu0 0.0
    %361 = vmatpush1.msra.mxu0 0.0
    %362 = vmatprep.subr.mxu0 0.0
    %363 = vmatpush1.msra.mxu0 0.0
    %364 = vmatprep.subr.mxu0 0.0
    %365 = vmatpush1.msra.mxu0 0.0
    %366 = vmatprep.subr.mxu0 0.0
    %367 = vmatpush1.msra.mxu0 0.0
    %368 = vmatprep.subr.mxu0 0.0
    %369 = vmatpush1.msra.mxu0 0.0
    %370 = vmatprep.subr.mxu0 0.0
    %371 = vmatpush1.msra.mxu0 0.0
    %372 = vmatprep.subr.mxu0 0.0
    %373 = vmatpush1.msra.mxu0 0.0
    %374 = vmatprep.subr.mxu0 0.0
    %375 = vmatpush1.msra.mxu0 0.0
    %376 = vmatprep.subr.mxu0 0.0
    %377 = vmatpush1.msra.mxu0 0.0
    %378 = vmatprep.subr.mxu0 0.0
    %379 = vmatpush1.msra.mxu0 0.0
    %380 = vmatprep.subr.mxu0 0.0
    %381 = vmatpush1.msra.mxu0 0.0
    %382 = vmatprep.subr.mxu0 0.0
    %383 = vmatpush1.msra.mxu0 0.0
    %384 = vmatprep.subr.mxu0 0.0
    %385 = vmatpush1.msra.mxu0 0.0
    %386 = vmatprep.subr.mxu0 0.0
    %387 = vmatpush1.msra.mxu0 0.0
    %388 = vmatprep.subr.mxu0 0.0
    %389 = vmatpush1.msra.mxu0 0.0
    %390 = vmatprep.subr.mxu0 0.0
    %391 = vmatpush1.msra.mxu0 0.0
    %392 = vmatprep.subr.mxu0 0.0
    %393 = vmatpush1.msra.mxu0 0.0
    %394 = vmatprep.subr.mxu0 0.0
    %395 = vmatpush1.msra.mxu0 0.0
    %396 = vmatprep.subr.mxu0 0.0
    %397 = vmatpush1.msra.mxu0 0.0
    %398 = vmatprep.subr.mxu0 0.0
    %399 = vmatpush1.msra.mxu0 0.0
    %400 = vmatprep.subr.mxu0 0.0
    %401 = vmatpush1.msra.mxu0 0.0
    %402 = vmatprep.subr.mxu0 0.0
    %403 = vmatpush1.msra.mxu0 0.0
    %404 = vmatprep.subr.mxu0 0.0
    %405 = vmatpush1.msra.mxu0 0.0
    %406 = vmatprep.subr.mxu0 0.0
    %407 = vmatpush1.msra.mxu0 0.0
    %408 = vmatprep.mubr.f32.mxu0 0.0
    %409 = vmatmul.mubr.f32.gmra.mrb[0].mxu0 %v342
    %v410 = vpop.f32.mrb[0].mxu0
    %v411 = vadd.f32 0.0, %v410
    %v412 = vpop.f32.mrb[0].mxu0
    %413 = vdwg.mxu0
    %v415 = vrot.slane %v411, 2
    %v417 = vadd.f32 %v95, %v415
    %v418 = vtanh.pop %v417
    %v420 = vrot.slane %v418, 6
    %v421 = vsel %vm107, %v420, 0
    %423 = vmatprep.subr.mxu0 0.0
    %424 = vmatpush1.msra.mxu0 %v103
    %425 = vmatprep.subr.mxu0 0.0
    %426 = vmatpush1.msra.mxu0 %v104
    %427 = vmatprep.subr.mxu0 0.0
    %428 = vmatpush1.msra.mxu0 %v105
    %429 = vmatprep.subr.mxu0 0.0
    %430 = vmatpush1.msra.mxu0 %v106
    %431 = vmatprep.subr.mxu0 0.0
    %432 = vmatpush1.msra.mxu0 0.0
    %433 = vmatprep.subr.mxu0 0.0
    %434 = vmatpush1.msra.mxu0 0.0
    %435 = vmatprep.subr.mxu0 0.0
    %436 = vmatpush1.msra.mxu0 0.0
    %437 = vmatprep.subr.mxu0 0.0
    %438 = vmatpush1.msra.mxu0 0.0
    %439 = vmatprep.subr.mxu0 0.0
    %440 = vmatpush1.msra.mxu0 0.0
    %441 = vmatprep.subr.mxu0 0.0
    %442 = vmatpush1.msra.mxu0 0.0
    %443 = vmatprep.subr.mxu0 0.0
    %444 = vmatpush1.msra.mxu0 0.0
    %445 = vmatprep.subr.mxu0 0.0
    %446 = vmatpush1.msra.mxu0 0.0
    %447 = vmatprep.subr.mxu0 0.0
    %448 = vmatpush1.msra.mxu0 0.0
    %449 = vmatprep.subr.mxu0 0.0
    %450 = vmatpush1.msra.mxu0 0.0
    %451 = vmatprep.subr.mxu0 0.0
    %452 = vmatpush1.msra.mxu0 0.0
    %453 = vmatprep.subr.mxu0 0.0
    %454 = vmatpush1.msra.mxu0 0.0
    %455 = vmatprep.subr.mxu0 0.0
    %456 = vmatpush1.msra.mxu0 0.0
    %457 = vmatprep.subr.mxu0 0.0
    %458 = vmatpush1.msra.mxu0 0.0
    %459 = vmatprep.subr.mxu0 0.0
    %460 = vmatpush1.msra.mxu0 0.0
    %461 = vmatprep.subr.mxu0 0.0
    %462 = vmatpush1.msra.mxu0 0.0
    %463 = vmatprep.subr.mxu0 0.0
    %464 = vmatpush1.msra.mxu0 0.0
    %465 = vmatprep.subr.mxu0 0.0
    %466 = vmatpush1.msra.mxu0 0.0
    %467 = vmatprep.subr.mxu0 0.0
    %468 = vmatpush1.msra.mxu0 0.0
    %469 = vmatprep.subr.mxu0 0.0
    %470 = vmatpush1.msra.mxu0 0.0
    %471 = vmatprep.subr.mxu0 0.0
    %472 = vmatpush1.msra.mxu0 0.0
    %473 = vmatprep.subr.mxu0 0.0
    %474 = vmatpush1.msra.mxu0 0.0
    %475 = vmatprep.subr.mxu0 0.0
    %476 = vmatpush1.msra.mxu0 0.0
    %477 = vmatprep.subr.mxu0 0.0
    %478 = vmatpush1.msra.mxu0 0.0
    %479 = vmatprep.subr.mxu0 0.0
    %480 = vmatpush1.msra.mxu0 0.0
    %481 = vmatprep.subr.mxu0 0.0
    %482 = vmatpush1.msra.mxu0 0.0
    %483 = vmatprep.subr.mxu0 0.0
    %484 = vmatpush1.msra.mxu0 0.0
    %485 = vmatprep.subr.mxu0 0.0
    %486 = vmatpush1.msra.mxu0 0.0
    %487 = vmatprep.mubr.f32.mxu0 0.0
    %488 = vmatmul.mubr.f32.gmra.mrb[0].mxu0 %v421
    %v489 = vpop.f32.mrb[0].mxu0
    %v490 = vadd.f32 0.0, %v489
    %v491 = vpop.f32.mrb[0].mxu0
    %492 = vdwg.mxu0
    %v493 = vadd.f32 %v100, %v490
    %v494 = vtanh.pop %v493
    %v496 = vsel %vm107, %v494, 0
    %498 = vmatprep.subr.mxu0 0.0
    %499 = vmatpush1.msra.mxu0 %v103
    %500 = vmatprep.subr.mxu0 0.0
    %501 = vmatpush1.msra.mxu0 %v104
    %502 = vmatprep.subr.mxu0 0.0
    %503 = vmatpush1.msra.mxu0 %v105
    %504 = vmatprep.subr.mxu0 0.0
    %505 = vmatpush1.msra.mxu0 %v106
    %506 = vmatprep.subr.mxu0 0.0
    %507 = vmatpush1.msra.mxu0 0.0
    %508 = vmatprep.subr.mxu0 0.0
    %509 = vmatpush1.msra.mxu0 0.0
    %510 = vmatprep.subr.mxu0 0.0
    %511 = vmatpush1.msra.mxu0 0.0
    %512 = vmatprep.subr.mxu0 0.0
    %513 = vmatpush1.msra.mxu0 0.0
    %514 = vmatprep.subr.mxu0 0.0
    %515 = vmatpush1.msra.mxu0 0.0
    %516 = vmatprep.subr.mxu0 0.0
    %517 = vmatpush1.msra.mxu0 0.0
    %518 = vmatprep.subr.mxu0 0.0
    %519 = vmatpush1.msra.mxu0 0.0
    %520 = vmatprep.subr.mxu0 0.0
    %521 = vmatpush1.msra.mxu0 0.0
    %522 = vmatprep.subr.mxu0 0.0
    %523 = vmatpush1.msra.mxu0 0.0
    %524 = vmatprep.subr.mxu0 0.0
    %525 = vmatpush1.msra.mxu0 0.0
    %526 = vmatprep.subr.mxu0 0.0
    %527 = vmatpush1.msra.mxu0 0.0
    %528 = vmatprep.subr.mxu0 0.0
    %529 = vmatpush1.msra.mxu0 0.0
    %530 = vmatprep.subr.mxu0 0.0
    %531 = vmatpush1.msra.mxu0 0.0
    %532 = vmatprep.subr.mxu0 0.0
    %533 = vmatpush1.msra.mxu0 0.0
    %534 = vmatprep.subr.mxu0 0.0
    %535 = vmatpush1.msra.mxu0 0.0
    %536 = vmatprep.subr.mxu0 0.0
    %537 = vmatpush1.msra.mxu0 0.0
    %538 = vmatprep.subr.mxu0 0.0
    %539 = vmatpush1.msra.mxu0 0.0
    %540 = vmatprep.subr.mxu0 0.0
    %541 = vmatpush1.msra.mxu0 0.0
    %542 = vmatprep.subr.mxu0 0.0
    %543 = vmatpush1.msra.mxu0 0.0
    %544 = vmatprep.subr.mxu0 0.0
    %545 = vmatpush1.msra.mxu0 0.0
    %546 = vmatprep.subr.mxu0 0.0
    %547 = vmatpush1.msra.mxu0 0.0
    %548 = vmatprep.subr.mxu0 0.0
    %549 = vmatpush1.msra.mxu0 0.0
    %550 = vmatprep.subr.mxu0 0.0
    %551 = vmatpush1.msra.mxu0 0.0
    %552 = vmatprep.subr.mxu0 0.0
    %553 = vmatpush1.msra.mxu0 0.0
    %554 = vmatprep.subr.mxu0 0.0
    %555 = vmatpush1.msra.mxu0 0.0
    %556 = vmatprep.subr.mxu0 0.0
    %557 = vmatpush1.msra.mxu0 0.0
    %558 = vmatprep.subr.mxu0 0.0
    %559 = vmatpush1.msra.mxu0 0.0
    %560 = vmatprep.subr.mxu0 0.0
    %561 = vmatpush1.msra.mxu0 0.0
    %562 = vmatprep.mubr.f32.mxu0 0.0
    %563 = vmatmul.mubr.f32.gmra.mrb[0].mxu0 %v496
    %v564 = vpop.f32.mrb[0].mxu0
    %v565 = vadd.f32 0.0, %v564
    %v566 = vpop.f32.mrb[0].mxu0
    %567 = vdwg.mxu0
    %v569 = vrot.slane %v565, 6
    %v571 = vadd.f32 %v100, %v569
    %v572 = vtanh.pop %v571
    %v574 = vrot.slane %v572, 2
    %v575 = vsel %vm107, %v574, 0
    %577 = vmatprep.subr.mxu0 0.0
    %578 = vmatpush1.msra.mxu0 %v103
    %579 = vmatprep.subr.mxu0 0.0
    %580 = vmatpush1.msra.mxu0 %v104
    %581 = vmatprep.subr.mxu0 0.0
    %582 = vmatpush1.msra.mxu0 %v105
    %583 = vmatprep.subr.mxu0 0.0
    %584 = vmatpush1.msra.mxu0 %v106
    %585 = vmatprep.subr.mxu0 0.0
    %586 = vmatpush1.msra.mxu0 0.0
    %587 = vmatprep.subr.mxu0 0.0
    %588 = vmatpush1.msra.mxu0 0.0
    %589 = vmatprep.subr.mxu0 0.0
    %590 = vmatpush1.msra.mxu0 0.0
    %591 = vmatprep.subr.mxu0 0.0
    %592 = vmatpush1.msra.mxu0 0.0
    %593 = vmatprep.subr.mxu0 0.0
    %594 = vmatpush1.msra.mxu0 0.0
    %595 = vmatprep.subr.mxu0 0.0
    %596 = vmatpush1.msra.mxu0 0.0
    %597 = vmatprep.subr.mxu0 0.0
    %598 = vmatpush1.msra.mxu0 0.0
    %599 = vmatprep.subr.mxu0 0.0
    %600 = vmatpush1.msra.mxu0 0.0
    %601 = vmatprep.subr.mxu0 0.0
    %602 = vmatpush1.msra.mxu0 0.0
    %603 = vmatprep.subr.mxu0 0.0
    %604 = vmatpush1.msra.mxu0 0.0
    %605 = vmatprep.subr.mxu0 0.0
    %606 = vmatpush1.msra.mxu0 0.0
    %607 = vmatprep.subr.mxu0 0.0
    %608 = vmatpush1.msra.mxu0 0.0
    %609 = vmatprep.subr.mxu0 0.0
    %610 = vmatpush1.msra.mxu0 0.0
    %611 = vmatprep.subr.mxu0 0.0
    %612 = vmatpush1.msra.mxu0 0.0
    %613 = vmatprep.subr.mxu0 0.0
    %614 = vmatpush1.msra.mxu0 0.0
    %615 = vmatprep.subr.mxu0 0.0
    %616 = vmatpush1.msra.mxu0 0.0
    %617 = vmatprep.subr.mxu0 0.0
    %618 = vmatpush1.msra.mxu0 0.0
    %619 = vmatprep.subr.mxu0 0.0
    %620 = vmatpush1.msra.mxu0 0.0
    %621 = vmatprep.subr.mxu0 0.0
    %622 = vmatpush1.msra.mxu0 0.0
    %623 = vmatprep.subr.mxu0 0.0
    %624 = vmatpush1.msra.mxu0 0.0
    %625 = vmatprep.subr.mxu0 0.0
    %626 = vmatpush1.msra.mxu0 0.0
    %627 = vmatprep.subr.mxu0 0.0
    %628 = vmatpush1.msra.mxu0 0.0
    %629 = vmatprep.subr.mxu0 0.0
    %630 = vmatpush1.msra.mxu0 0.0
    %631 = vmatprep.subr.mxu0 0.0
    %632 = vmatpush1.msra.mxu0 0.0
    %633 = vmatprep.subr.mxu0 0.0
    %634 = vmatpush1.msra.mxu0 0.0
    %635 = vmatprep.subr.mxu0 0.0
    %636 = vmatpush1.msra.mxu0 0.0
    %637 = vmatprep.subr.mxu0 0.0
    %638 = vmatpush1.msra.mxu0 0.0
    %639 = vmatprep.subr.mxu0 0.0
    %640 = vmatpush1.msra.mxu0 0.0
    %641 = vmatprep.mubr.f32.mxu0 0.0
    %642 = vmatmul.mubr.f32.gmra.mrb[0].mxu0 %v575
    %v643 = vpop.f32.mrb[0].mxu0
    %v644 = vadd.f32 0.0, %v643
    %v645 = vpop.f32.mrb[0].mxu0
    %646 = vdwg.mxu0
    %v648 = vrot.slane %v644, 4
    %v650 = vadd.f32 %v100, %v648
    %v651 = vtanh.pop %v650
    %v653 = vrot.slane %v651, 4
    %v654 = vsel %vm107, %v653, 0
    %656 = vmatprep.subr.mxu0 0.0
    %657 = vmatpush1.msra.mxu0 %v103
    %658 = vmatprep.subr.mxu0 0.0
    %659 = vmatpush1.msra.mxu0 %v104
    %660 = vmatprep.subr.mxu0 0.0
    %661 = vmatpush1.msra.mxu0 %v105
    %662 = vmatprep.subr.mxu0 0.0
    %663 = vmatpush1.msra.mxu0 %v106
    %664 = vmatprep.subr.mxu0 0.0
    %665 = vmatpush1.msra.mxu0 0.0
    %666 = vmatprep.subr.mxu0 0.0
    %667 = vmatpush1.msra.mxu0 0.0
    %668 = vmatprep.subr.mxu0 0.0
    %669 = vmatpush1.msra.mxu0 0.0
    %670 = vmatprep.subr.mxu0 0.0
    %671 = vmatpush1.msra.mxu0 0.0
    %672 = vmatprep.subr.mxu0 0.0
    %673 = vmatpush1.msra.mxu0 0.0
    %674 = vmatprep.subr.mxu0 0.0
    %675 = vmatpush1.msra.mxu0 0.0
    %676 = vmatprep.subr.mxu0 0.0
    %677 = vmatpush1.msra.mxu0 0.0
    %678 = vmatprep.subr.mxu0 0.0
    %679 = vmatpush1.msra.mxu0 0.0
    %680 = vmatprep.subr.mxu0 0.0
    %681 = vmatpush1.msra.mxu0 0.0
    %682 = vmatprep.subr.mxu0 0.0
    %683 = vmatpush1.msra.mxu0 0.0
    %684 = vmatprep.subr.mxu0 0.0
    %685 = vmatpush1.msra.mxu0 0.0
    %686 = vmatprep.subr.mxu0 0.0
    %687 = vmatpush1.msra.mxu0 0.0
    %688 = vmatprep.subr.mxu0 0.0
    %689 = vmatpush1.msra.mxu0 0.0
    %690 = vmatprep.subr.mxu0 0.0
    %691 = vmatpush1.msra.mxu0 0.0
    %692 = vmatprep.subr.mxu0 0.0
    %693 = vmatpush1.msra.mxu0 0.0
    %694 = vmatprep.subr.mxu0 0.0
    %695 = vmatpush1.msra.mxu0 0.0
    %696 = vmatprep.subr.mxu0 0.0
    %697 = vmatpush1.msra.mxu0 0.0
    %698 = vmatprep.subr.mxu0 0.0
    %699 = vmatpush1.msra.mxu0 0.0
    %700 = vmatprep.subr.mxu0 0.0
    %701 = vmatpush1.msra.mxu0 0.0
    %702 = vmatprep.subr.mxu0 0.0
    %703 = vmatpush1.msra.mxu0 0.0
    %704 = vmatprep.subr.mxu0 0.0
    %705 = vmatpush1.msra.mxu0 0.0
    %706 = vmatprep.subr.mxu0 0.0
    %707 = vmatpush1.msra.mxu0 0.0
    %708 = vmatprep.subr.mxu0 0.0
    %709 = vmatpush1.msra.mxu0 0.0
    %710 = vmatprep.subr.mxu0 0.0
    %711 = vmatpush1.msra.mxu0 0.0
    %712 = vmatprep.subr.mxu0 0.0
    %713 = vmatpush1.msra.mxu0 0.0
    %714 = vmatprep.subr.mxu0 0.0
    %715 = vmatpush1.msra.mxu0 0.0
    %716 = vmatprep.subr.mxu0 0.0
    %717 = vmatpush1.msra.mxu0 0.0
    %718 = vmatprep.subr.mxu0 0.0
    %719 = vmatpush1.msra.mxu0 0.0
    %720 = vmatprep.mubr.f32.mxu0 0.0
    %721 = vmatmul.mubr.f32.gmra.mrb[0].mxu0 %v654
    %v722 = vpop.f32.mrb[0].mxu0
    %v723 = vadd.f32 0.0, %v722
    %v724 = vpop.f32.mrb[0].mxu0
    %725 = vdwg.mxu0
    %v727 = vrot.slane %v723, 2
    %v729 = vadd.f32 %v100, %v727
    %v730 = vtanh.pop %v729
    %v731 = vld [vmem:[%s1 + $0x38] sm:$0xff]
    %v732 = vld [vmem:[%s1 + $0x40] sm:$0xff]
    %v733 = vld [vmem:[%s1 + $0x48] sm:$0xff]
    %v734 = vld [vmem:[%s1 + $0x50] sm:$0xff]
    %v735 = vld [vmem:[%s1 + $0x58] sm:$0x1]
    %v736 = vlaneseq
    %v737 = vshrl.u32 %v736, 7
    %v738 = vsub.s32 0, %v737
    %v739 = vrot.slane %v735, %v738
    %v741 = vrot.slane %v730, 6
    %v742 = vsel %vm107, %v741, 0
    %744 = vmatprep.subr.mxu0 0.0
    %745 = vmatpush1.msra.mxu0 %v731
    %746 = vmatprep.subr.mxu0 0.0
    %747 = vmatpush1.msra.mxu0 %v732
    %748 = vmatprep.subr.mxu0 0.0
    %749 = vmatpush1.msra.mxu0 %v733
    %750 = vmatprep.subr.mxu0 0.0
    %751 = vmatpush1.msra.mxu0 %v734
    %752 = vmatprep.subr.mxu0 0.0
    %753 = vmatpush1.msra.mxu0 0.0
    %754 = vmatprep.subr.mxu0 0.0
    %755 = vmatpush1.msra.mxu0 0.0
    %756 = vmatprep.subr.mxu0 0.0
    %757 = vmatpush1.msra.mxu0 0.0
    %758 = vmatprep.subr.mxu0 0.0
    %759 = vmatpush1.msra.mxu0 0.0
    %760 = vmatprep.subr.mxu0 0.0
    %761 = vmatpush1.msra.mxu0 0.0
    %762 = vmatprep.subr.mxu0 0.0
    %763 = vmatpush1.msra.mxu0 0.0
    %764 = vmatprep.subr.mxu0 0.0
    %765 = vmatpush1.msra.mxu0 0.0
    %766 = vmatprep.subr.mxu0 0.0
    %767 = vmatpush1.msra.mxu0 0.0
    %768 = vmatprep.subr.mxu0 0.0
    %769 = vmatpush1.msra.mxu0 0.0
    %770 = vmatprep.subr.mxu0 0.0
    %771 = vmatpush1.msra.mxu0 0.0
    %772 = vmatprep.subr.mxu0 0.0
    %773 = vmatpush1.msra.mxu0 0.0
    %774 = vmatprep.subr.mxu0 0.0
    %775 = vmatpush1.msra.mxu0 0.0
    %776 = vmatprep.subr.mxu0 0.0
    %777 = vmatpush1.msra.mxu0 0.0
    %778 = vmatprep.subr.mxu0 0.0
    %779 = vmatpush1.msra.mxu0 0.0
    %780 = vmatprep.subr.mxu0 0.0
    %781 = vmatpush1.msra.mxu0 0.0
    %782 = vmatprep.subr.mxu0 0.0
    %783 = vmatpush1.msra.mxu0 0.0
    %784 = vmatprep.subr.mxu0 0.0
    %785 = vmatpush1.msra.mxu0 0.0
    %786 = vmatprep.subr.mxu0 0.0
    %787 = vmatpush1.msra.mxu0 0.0
    %788 = vmatprep.subr.mxu0 0.0
    %789 = vmatpush1.msra.mxu0 0.0
    %790 = vmatprep.subr.mxu0 0.0
    %791 = vmatpush1.msra.mxu0 0.0
    %792 = vmatprep.subr.mxu0 0.0
    %793 = vmatpush1.msra.mxu0 0.0
    %794 = vmatprep.subr.mxu0 0.0
    %795 = vmatpush1.msra.mxu0 0.0
    %796 = vmatprep.subr.mxu0 0.0
    %797 = vmatpush1.msra.mxu0 0.0
    %798 = vmatprep.subr.mxu0 0.0
    %799 = vmatpush1.msra.mxu0 0.0
    %800 = vmatprep.subr.mxu0 0.0
    %801 = vmatpush1.msra.mxu0 0.0
    %802 = vmatprep.subr.mxu0 0.0
    %803 = vmatpush1.msra.mxu0 0.0
    %804 = vmatprep.subr.mxu0 0.0
    %805 = vmatpush1.msra.mxu0 0.0
    %806 = vmatprep.subr.mxu0 0.0
    %807 = vmatpush1.msra.mxu0 0.0
    %808 = vmatprep.mubr.f32.mxu0 0.0
    %809 = vmatmul.mubr.f32.gmra.mrb[0].mxu0 %v742
    %v810 = vpop.f32.mrb[0].mxu0
    %v811 = vadd.f32 %v739, %v810
    %v812 = vpop.f32.mrb[0].mxu0
    %813 = vdwg.mxu0
    %v814 = vld [vmem:[%s1 + $0x68] sm:$0xff]
    %v815 = vld [vmem:[%s1 + $0x70] sm:$0xff]
    %v816 = vld [vmem:[%s1 + $0x78] sm:$0xff]
    %v817 = vld [vmem:[%s1 + $0x80] sm:$0xff]
    %v818 = vld [vmem:[%s1 + $0x60] sm:$0xff]
    %v819 = vld [vmem:[%s1 + $0x88] sm:$0x1]
    %v820 = vlaneseq
    %v821 = vshrl.u32 %v820, 7
    %v822 = vsub.s32 0, %v821
    %v823 = vrot.slane %v819, %v822
    %vm824 = vcmask 64512
    %v826 = vsel %vm824, %v811, 0
    %828 = vmatprep.subr.mxu0 0.0
    %829 = vmatpush1.msra.mxu0 %v818
    %830 = vmatprep.subr.mxu0 0.0
    %831 = vmatpush1.msra.mxu0 0.0
    %832 = vmatprep.subr.mxu0 0.0
    %833 = vmatpush1.msra.mxu0 0.0
    %834 = vmatprep.subr.mxu0 0.0
    %835 = vmatpush1.msra.mxu0 0.0
    %836 = vmatprep.subr.mxu0 0.0
    %837 = vmatpush1.msra.mxu0 0.0
    %838 = vmatprep.subr.mxu0 0.0
    %839 = vmatpush1.msra.mxu0 0.0
    %840 = vmatprep.subr.mxu0 0.0
    %841 = vmatpush1.msra.mxu0 0.0
    %842 = vmatprep.subr.mxu0 0.0
    %843 = vmatpush1.msra.mxu0 0.0
    %844 = vmatprep.subr.mxu0 0.0
    %845 = vmatpush1.msra.mxu0 0.0
    %846 = vmatprep.subr.mxu0 0.0
    %847 = vmatpush1.msra.mxu0 0.0
    %848 = vmatprep.subr.mxu0 0.0
    %849 = vmatpush1.msra.mxu0 0.0
    %850 = vmatprep.subr.mxu0 0.0
    %851 = vmatpush1.msra.mxu0 0.0
    %852 = vmatprep.subr.mxu0 0.0
    %853 = vmatpush1.msra.mxu0 0.0
    %854 = vmatprep.subr.mxu0 0.0
    %855 = vmatpush1.msra.mxu0 0.0
    %856 = vmatprep.subr.mxu0 0.0
    %857 = vmatpush1.msra.mxu0 0.0
    %858 = vmatprep.subr.mxu0 0.0
    %859 = vmatpush1.msra.mxu0 0.0
    %860 = vmatprep.subr.mxu0 0.0
    %861 = vmatpush1.msra.mxu0 0.0
    %862 = vmatprep.subr.mxu0 0.0
    %863 = vmatpush1.msra.mxu0 0.0
    %864 = vmatprep.subr.mxu0 0.0
    %865 = vmatpush1.msra.mxu0 0.0
    %866 = vmatprep.subr.mxu0 0.0
    %867 = vmatpush1.msra.mxu0 0.0
    %868 = vmatprep.subr.mxu0 0.0
    %869 = vmatpush1.msra.mxu0 0.0
    %870 = vmatprep.subr.mxu0 0.0
    %871 = vmatpush1.msra.mxu0 0.0
    %872 = vmatprep.subr.mxu0 0.0
    %873 = vmatpush1.msra.mxu0 0.0
    %874 = vmatprep.subr.mxu0 0.0
    %875 = vmatpush1.msra.mxu0 0.0
    %876 = vmatprep.subr.mxu0 0.0
    %877 = vmatpush1.msra.mxu0 0.0
    %878 = vmatprep.subr.mxu0 0.0
    %879 = vmatpush1.msra.mxu0 0.0
    %880 = vmatprep.subr.mxu0 0.0
    %881 = vmatpush1.msra.mxu0 0.0
    %882 = vmatprep.subr.mxu0 0.0
    %883 = vmatpush1.msra.mxu0 0.0
    %884 = vmatprep.subr.mxu0 0.0
    %885 = vmatpush1.msra.mxu0 0.0
    %886 = vmatprep.subr.mxu0 0.0
    %887 = vmatpush1.msra.mxu0 0.0
    %888 = vmatprep.subr.mxu0 0.0
    %889 = vmatpush1.msra.mxu0 0.0
    %890 = vmatprep.subr.mxu0 0.0
    %891 = vmatpush1.msra.mxu0 0.0
    %892 = vmatprep.mubr.f32.mxu0 0.0
    %893 = vmatmul.mubr.f32.gmra.mrb[0].mxu0 %v826
    %v894 = vpop.f32.mrb[0].mxu0
    %v895 = vadd.f32 %v823, %v894
    %v896 = vpop.f32.mrb[0].mxu0
    %897 = vdwg.mxu0
    %898 = vmatprep.subr.mxu0 0.0
    %899 = vmatpush1.msra.mxu0 %v814
    %900 = vmatprep.subr.mxu0 0.0
    %901 = vmatpush1.msra.mxu0 %v815
    %902 = vmatprep.subr.mxu0 0.0
    %903 = vmatpush1.msra.mxu0 %v816
    %904 = vmatprep.subr.mxu0 0.0
    %905 = vmatpush1.msra.mxu0 %v817
    %906 = vmatprep.subr.mxu0 0.0
    %907 = vmatpush1.msra.mxu0 0.0
    %908 = vmatprep.subr.mxu0 0.0
    %909 = vmatpush1.msra.mxu0 0.0
    %910 = vmatprep.subr.mxu0 0.0
    %911 = vmatpush1.msra.mxu0 0.0
    %912 = vmatprep.subr.mxu0 0.0
    %913 = vmatpush1.msra.mxu0 0.0
    %914 = vmatprep.subr.mxu0 0.0
    %915 = vmatpush1.msra.mxu0 0.0
    %916 = vmatprep.subr.mxu0 0.0
    %917 = vmatpush1.msra.mxu0 0.0
    %918 = vmatprep.subr.mxu0 0.0
    %919 = vmatpush1.msra.mxu0 0.0
    %920 = vmatprep.subr.mxu0 0.0
    %921 = vmatpush1.msra.mxu0 0.0
    %922 = vmatprep.subr.mxu0 0.0
    %923 = vmatpush1.msra.mxu0 0.0
    %924 = vmatprep.subr.mxu0 0.0
    %925 = vmatpush1.msra.mxu0 0.0
    %926 = vmatprep.subr.mxu0 0.0
    %927 = vmatpush1.msra.mxu0 0.0
    %928 = vmatprep.subr.mxu0 0.0
    %929 = vmatpush1.msra.mxu0 0.0
    %930 = vmatprep.subr.mxu0 0.0
    %931 = vmatpush1.msra.mxu0 0.0
    %932 = vmatprep.subr.mxu0 0.0
    %933 = vmatpush1.msra.mxu0 0.0
    %934 = vmatprep.subr.mxu0 0.0
    %935 = vmatpush1.msra.mxu0 0.0
    %936 = vmatprep.subr.mxu0 0.0
    %937 = vmatpush1.msra.mxu0 0.0
    %938 = vmatprep.subr.mxu0 0.0
    %939 = vmatpush1.msra.mxu0 0.0
    %940 = vmatprep.subr.mxu0 0.0
    %941 = vmatpush1.msra.mxu0 0.0
    %942 = vmatprep.subr.mxu0 0.0
    %943 = vmatpush1.msra.mxu0 0.0
    %944 = vmatprep.subr.mxu0 0.0
    %945 = vmatpush1.msra.mxu0 0.0
    %946 = vmatprep.subr.mxu0 0.0
    %947 = vmatpush1.msra.mxu0 0.0
    %948 = vmatprep.subr.mxu0 0.0
    %949 = vmatpush1.msra.mxu0 0.0
    %950 = vmatprep.subr.mxu0 0.0
    %951 = vmatpush1.msra.mxu0 0.0
    %952 = vmatprep.subr.mxu0 0.0
    %953 = vmatpush1.msra.mxu0 0.0
    %954 = vmatprep.subr.mxu0 0.0
    %955 = vmatpush1.msra.mxu0 0.0
    %956 = vmatprep.subr.mxu0 0.0
    %957 = vmatpush1.msra.mxu0 0.0
    %958 = vmatprep.subr.mxu0 0.0
    %959 = vmatpush1.msra.mxu0 0.0
    %960 = vmatprep.subr.mxu0 0.0
    %961 = vmatpush1.msra.mxu0 0.0
    %962 = vmatprep.mubr.f32.mxu0 0.0
    %963 = vmatmul.mubr.f32.gmra.mrb[0].mxu0 %v109
    %v964 = vpop.f32.mrb[0].mxu0
    %v965 = vadd.f32 0.0, %v964
    %v966 = vpop.f32.mrb[0].mxu0
    %967 = vdwg.mxu0
    %v968 = vadd.f32 %v895, %v965
    %v969 = vtanh.pop %v968
    %v971 = vsel %vm107, %v969, 0
    %973 = vmatprep.subr.mxu0 0.0
    %974 = vmatpush1.msra.mxu0 %v814
    %975 = vmatprep.subr.mxu0 0.0
    %976 = vmatpush1.msra.mxu0 %v815
    %977 = vmatprep.subr.mxu0 0.0
    %978 = vmatpush1.msra.mxu0 %v816
    %979 = vmatprep.subr.mxu0 0.0
    %980 = vmatpush1.msra.mxu0 %v817
    %981 = vmatprep.subr.mxu0 0.0
    %982 = vmatpush1.msra.mxu0 0.0
    %983 = vmatprep.subr.mxu0 0.0
    %984 = vmatpush1.msra.mxu0 0.0
    %985 = vmatprep.subr.mxu0 0.0
    %986 = vmatpush1.msra.mxu0 0.0
    %987 = vmatprep.subr.mxu0 0.0
    %988 = vmatpush1.msra.mxu0 0.0
    %989 = vmatprep.subr.mxu0 0.0
    %990 = vmatpush1.msra.mxu0 0.0
    %991 = vmatprep.subr.mxu0 0.0
    %992 = vmatpush1.msra.mxu0 0.0
    %993 = vmatprep.subr.mxu0 0.0
    %994 = vmatpush1.msra.mxu0 0.0
    %995 = vmatprep.subr.mxu0 0.0
    %996 = vmatpush1.msra.mxu0 0.0
    %997 = vmatprep.subr.mxu0 0.0
    %998 = vmatpush1.msra.mxu0 0.0
    %999 = vmatprep.subr.mxu0 0.0
    %1000 = vmatpush1.msra.mxu0 0.0
    %1001 = vmatprep.subr.mxu0 0.0
    %1002 = vmatpush1.msra.mxu0 0.0
    %1003 = vmatprep.subr.mxu0 0.0
    %1004 = vmatpush1.msra.mxu0 0.0
    %1005 = vmatprep.subr.mxu0 0.0
    %1006 = vmatpush1.msra.mxu0 0.0
    %1007 = vmatprep.subr.mxu0 0.0
    %1008 = vmatpush1.msra.mxu0 0.0
    %1009 = vmatprep.subr.mxu0 0.0
    %1010 = vmatpush1.msra.mxu0 0.0
    %1011 = vmatprep.subr.mxu0 0.0
    %1012 = vmatpush1.msra.mxu0 0.0
    %1013 = vmatprep.subr.mxu0 0.0
    %1014 = vmatpush1.msra.mxu0 0.0
    %1015 = vmatprep.subr.mxu0 0.0
    %1016 = vmatpush1.msra.mxu0 0.0
    %1017 = vmatprep.subr.mxu0 0.0
    %1018 = vmatpush1.msra.mxu0 0.0
    %1019 = vmatprep.subr.mxu0 0.0
    %1020 = vmatpush1.msra.mxu0 0.0
    %1021 = vmatprep.subr.mxu0 0.0
    %1022 = vmatpush1.msra.mxu0 0.0
    %1023 = vmatprep.subr.mxu0 0.0
    %1024 = vmatpush1.msra.mxu0 0.0
    %1025 = vmatprep.subr.mxu0 0.0
    %1026 = vmatpush1.msra.mxu0 0.0
    %1027 = vmatprep.subr.mxu0 0.0
    %1028 = vmatpush1.msra.mxu0 0.0
    %1029 = vmatprep.subr.mxu0 0.0
    %1030 = vmatpush1.msra.mxu0 0.0
    %1031 = vmatprep.subr.mxu0 0.0
    %1032 = vmatpush1.msra.mxu0 0.0
    %1033 = vmatprep.subr.mxu0 0.0
    %1034 = vmatpush1.msra.mxu0 0.0
    %1035 = vmatprep.subr.mxu0 0.0
    %1036 = vmatpush1.msra.mxu0 0.0
    %1037 = vmatprep.mubr.f32.mxu0 0.0
    %1038 = vmatmul.mubr.f32.gmra.mrb[0].mxu0 %v971
    %v1039 = vpop.f32.mrb[0].mxu0
    %v1040 = vadd.f32 0.0, %v1039
    %v1041 = vpop.f32.mrb[0].mxu0
    %1042 = vdwg.mxu0
    %v1044 = vrot.slane %v1040, 7
    %v1046 = vadd.f32 %v895, %v1044
    %v1047 = vtanh.pop %v1046
    %v1049 = vrot.slane %v1047, 1
    %v1050 = vsel %vm107, %v1049, 0
    %1052 = vmatprep.subr.mxu0 0.0
    %1053 = vmatpush1.msra.mxu0 %v814
    %1054 = vmatprep.subr.mxu0 0.0
    %1055 = vmatpush1.msra.mxu0 %v815
    %1056 = vmatprep.subr.mxu0 0.0
    %1057 = vmatpush1.msra.mxu0 %v816
    %1058 = vmatprep.subr.mxu0 0.0
    %1059 = vmatpush1.msra.mxu0 %v817
    %1060 = vmatprep.subr.mxu0 0.0
    %1061 = vmatpush1.msra.mxu0 0.0
    %1062 = vmatprep.subr.mxu0 0.0
    %1063 = vmatpush1.msra.mxu0 0.0
    %1064 = vmatprep.subr.mxu0 0.0
    %1065 = vmatpush1.msra.mxu0 0.0
    %1066 = vmatprep.subr.mxu0 0.0
    %1067 = vmatpush1.msra.mxu0 0.0
    %1068 = vmatprep.subr.mxu0 0.0
    %1069 = vmatpush1.msra.mxu0 0.0
    %1070 = vmatprep.subr.mxu0 0.0
    %1071 = vmatpush1.msra.mxu0 0.0
    %1072 = vmatprep.subr.mxu0 0.0
    %1073 = vmatpush1.msra.mxu0 0.0
    %1074 = vmatprep.subr.mxu0 0.0
    %1075 = vmatpush1.msra.mxu0 0.0
    %1076 = vmatprep.subr.mxu0 0.0
    %1077 = vmatpush1.msra.mxu0 0.0
    %1078 = vmatprep.subr.mxu0 0.0
    %1079 = vmatpush1.msra.mxu0 0.0
    %1080 = vmatprep.subr.mxu0 0.0
    %1081 = vmatpush1.msra.mxu0 0.0
    %1082 = vmatprep.subr.mxu0 0.0
    %1083 = vmatpush1.msra.mxu0 0.0
    %1084 = vmatprep.subr.mxu0 0.0
    %1085 = vmatpush1.msra.mxu0 0.0
    %1086 = vmatprep.subr.mxu0 0.0
    %1087 = vmatpush1.msra.mxu0 0.0
    %1088 = vmatprep.subr.mxu0 0.0
    %1089 = vmatpush1.msra.mxu0 0.0
    %1090 = vmatprep.subr.mxu0 0.0
    %1091 = vmatpush1.msra.mxu0 0.0
    %1092 = vmatprep.subr.mxu0 0.0
    %1093 = vmatpush1.msra.mxu0 0.0
    %1094 = vmatprep.subr.mxu0 0.0
    %1095 = vmatpush1.msra.mxu0 0.0
    %1096 = vmatprep.subr.mxu0 0.0
    %1097 = vmatpush1.msra.mxu0 0.0
    %1098 = vmatprep.subr.mxu0 0.0
    %1099 = vmatpush1.msra.mxu0 0.0
    %1100 = vmatprep.subr.mxu0 0.0
    %1101 = vmatpush1.msra.mxu0 0.0
    %1102 = vmatprep.subr.mxu0 0.0
    %1103 = vmatpush1.msra.mxu0 0.0
    %1104 = vmatprep.subr.mxu0 0.0
    %1105 = vmatpush1.msra.mxu0 0.0
    %1106 = vmatprep.subr.mxu0 0.0
    %1107 = vmatpush1.msra.mxu0 0.0
    %1108 = vmatprep.subr.mxu0 0.0
    %1109 = vmatpush1.msra.mxu0 0.0
    %1110 = vmatprep.subr.mxu0 0.0
    %1111 = vmatpush1.msra.mxu0 0.0
    %1112 = vmatprep.subr.mxu0 0.0
    %1113 = vmatpush1.msra.mxu0 0.0
    %1114 = vmatprep.subr.mxu0 0.0
    %1115 = vmatpush1.msra.mxu0 0.0
    %1116 = vmatprep.mubr.f32.mxu0 0.0
    %1117 = vmatmul.mubr.f32.gmra.mrb[0].mxu0 %v1050
    %v1118 = vpop.f32.mrb[0].mxu0
    %v1119 = vadd.f32 0.0, %v1118
    %v1120 = vpop.f32.mrb[0].mxu0
    %1121 = vdwg.mxu0
    %v1122 = vadd.f32 %v895, %v1119
    %v1123 = vtanh.pop %v1122
    %v1125 = vsel %vm107, %v1123, 0
    %1127 = vmatprep.subr.mxu0 0.0
    %1128 = vmatpush1.msra.mxu0 %v814
    %1129 = vmatprep.subr.mxu0 0.0
    %1130 = vmatpush1.msra.mxu0 %v815
    %1131 = vmatprep.subr.mxu0 0.0
    %1132 = vmatpush1.msra.mxu0 %v816
    %1133 = vmatprep.subr.mxu0 0.0
    %1134 = vmatpush1.msra.mxu0 %v817
    %1135 = vmatprep.subr.mxu0 0.0
    %1136 = vmatpush1.msra.mxu0 0.0
    %1137 = vmatprep.subr.mxu0 0.0
    %1138 = vmatpush1.msra.mxu0 0.0
    %1139 = vmatprep.subr.mxu0 0.0
    %1140 = vmatpush1.msra.mxu0 0.0
    %1141 = vmatprep.subr.mxu0 0.0
    %1142 = vmatpush1.msra.mxu0 0.0
    %1143 = vmatprep.subr.mxu0 0.0
    %1144 = vmatpush1.msra.mxu0 0.0
    %1145 = vmatprep.subr.mxu0 0.0
    %1146 = vmatpush1.msra.mxu0 0.0
    %1147 = vmatprep.subr.mxu0 0.0
    %1148 = vmatpush1.msra.mxu0 0.0
    %1149 = vmatprep.subr.mxu0 0.0
    %1150 = vmatpush1.msra.mxu0 0.0
    %1151 = vmatprep.subr.mxu0 0.0
    %1152 = vmatpush1.msra.mxu0 0.0
    %1153 = vmatprep.subr.mxu0 0.0
    %1154 = vmatpush1.msra.mxu0 0.0
    %1155 = vmatprep.subr.mxu0 0.0
    %1156 = vmatpush1.msra.mxu0 0.0
    %1157 = vmatprep.subr.mxu0 0.0
    %1158 = vmatpush1.msra.mxu0 0.0
    %1159 = vmatprep.subr.mxu0 0.0
    %1160 = vmatpush1.msra.mxu0 0.0
    %1161 = vmatprep.subr.mxu0 0.0
    %1162 = vmatpush1.msra.mxu0 0.0
    %1163 = vmatprep.subr.mxu0 0.0
    %1164 = vmatpush1.msra.mxu0 0.0
    %1165 = vmatprep.subr.mxu0 0.0
    %1166 = vmatpush1.msra.mxu0 0.0
    %1167 = vmatprep.subr.mxu0 0.0
    %1168 = vmatpush1.msra.mxu0 0.0
    %1169 = vmatprep.subr.mxu0 0.0
    %1170 = vmatpush1.msra.mxu0 0.0
    %1171 = vmatprep.subr.mxu0 0.0
    %1172 = vmatpush1.msra.mxu0 0.0
    %1173 = vmatprep.subr.mxu0 0.0
    %1174 = vmatpush1.msra.mxu0 0.0
    %1175 = vmatprep.subr.mxu0 0.0
    %1176 = vmatpush1.msra.mxu0 0.0
    %1177 = vmatprep.subr.mxu0 0.0
    %1178 = vmatpush1.msra.mxu0 0.0
    %1179 = vmatprep.subr.mxu0 0.0
    %1180 = vmatpush1.msra.mxu0 0.0
    %1181 = vmatprep.subr.mxu0 0.0
    %1182 = vmatpush1.msra.mxu0 0.0
    %1183 = vmatprep.subr.mxu0 0.0
    %1184 = vmatpush1.msra.mxu0 0.0
    %1185 = vmatprep.subr.mxu0 0.0
    %1186 = vmatpush1.msra.mxu0 0.0
    %1187 = vmatprep.subr.mxu0 0.0
    %1188 = vmatpush1.msra.mxu0 0.0
    %1189 = vmatprep.subr.mxu0 0.0
    %1190 = vmatpush1.msra.mxu0 0.0
    %1191 = vmatprep.mubr.f32.mxu0 0.0
    %1192 = vmatmul.mubr.f32.gmra.mrb[0].mxu0 %v1125
    %v1193 = vpop.f32.mrb[0].mxu0
    %v1194 = vadd.f32 0.0, %v1193
    %v1195 = vpop.f32.mrb[0].mxu0
    %1196 = vdwg.mxu0
    %v1198 = vrot.slane %v1194, 7
    %v1200 = vadd.f32 %v895, %v1198
    %v1201 = vtanh.pop %v1200
    %v1203 = vrot.slane %v1201, 1
    %v1204 = vsel %vm107, %v1203, 0
    %1206 = vmatprep.subr.mxu0 0.0
    %1207 = vmatpush1.msra.mxu0 %v814
    %1208 = vmatprep.subr.mxu0 0.0
    %1209 = vmatpush1.msra.mxu0 %v815
    %1210 = vmatprep.subr.mxu0 0.0
    %1211 = vmatpush1.msra.mxu0 %v816
    %1212 = vmatprep.subr.mxu0 0.0
    %1213 = vmatpush1.msra.mxu0 %v817
    %1214 = vmatprep.subr.mxu0 0.0
    %1215 = vmatpush1.msra.mxu0 0.0
    %1216 = vmatprep.subr.mxu0 0.0
    %1217 = vmatpush1.msra.mxu0 0.0
    %1218 = vmatprep.subr.mxu0 0.0
    %1219 = vmatpush1.msra.mxu0 0.0
    %1220 = vmatprep.subr.mxu0 0.0
    %1221 = vmatpush1.msra.mxu0 0.0
    %1222 = vmatprep.subr.mxu0 0.0
    %1223 = vmatpush1.msra.mxu0 0.0
    %1224 = vmatprep.subr.mxu0 0.0
    %1225 = vmatpush1.msra.mxu0 0.0
    %1226 = vmatprep.subr.mxu0 0.0
    %1227 = vmatpush1.msra.mxu0 0.0
    %1228 = vmatprep.subr.mxu0 0.0
    %1229 = vmatpush1.msra.mxu0 0.0
    %1230 = vmatprep.subr.mxu0 0.0
    %1231 = vmatpush1.msra.mxu0 0.0
    %1232 = vmatprep.subr.mxu0 0.0
    %1233 = vmatpush1.msra.mxu0 0.0
    %1234 = vmatprep.subr.mxu0 0.0
    %1235 = vmatpush1.msra.mxu0 0.0
    %1236 = vmatprep.subr.mxu0 0.0
    %1237 = vmatpush1.msra.mxu0 0.0
    %1238 = vmatprep.subr.mxu0 0.0
    %1239 = vmatpush1.msra.mxu0 0.0
    %1240 = vmatprep.subr.mxu0 0.0
    %1241 = vmatpush1.msra.mxu0 0.0
    %1242 = vmatprep.subr.mxu0 0.0
    %1243 = vmatpush1.msra.mxu0 0.0
    %1244 = vmatprep.subr.mxu0 0.0
    %1245 = vmatpush1.msra.mxu0 0.0
    %1246 = vmatprep.subr.mxu0 0.0
    %1247 = vmatpush1.msra.mxu0 0.0
    %1248 = vmatprep.subr.mxu0 0.0
    %1249 = vmatpush1.msra.mxu0 0.0
    %1250 = vmatprep.subr.mxu0 0.0
    %1251 = vmatpush1.msra.mxu0 0.0
    %1252 = vmatprep.subr.mxu0 0.0
    %1253 = vmatpush1.msra.mxu0 0.0
    %1254 = vmatprep.subr.mxu0 0.0
    %1255 = vmatpush1.msra.mxu0 0.0
    %1256 = vmatprep.subr.mxu0 0.0
    %1257 = vmatpush1.msra.mxu0 0.0
    %1258 = vmatprep.subr.mxu0 0.0
    %1259 = vmatpush1.msra.mxu0 0.0
    %1260 = vmatprep.subr.mxu0 0.0
    %1261 = vmatpush1.msra.mxu0 0.0
    %1262 = vmatprep.subr.mxu0 0.0
    %1263 = vmatpush1.msra.mxu0 0.0
    %1264 = vmatprep.subr.mxu0 0.0
    %1265 = vmatpush1.msra.mxu0 0.0
    %1266 = vmatprep.subr.mxu0 0.0
    %1267 = vmatpush1.msra.mxu0 0.0
    %1268 = vmatprep.subr.mxu0 0.0
    %1269 = vmatpush1.msra.mxu0 0.0
    %1270 = vmatprep.mubr.f32.mxu0 0.0
    %1271 = vmatmul.mubr.f32.gmra.mrb[0].mxu0 %v1204
    %v1272 = vpop.f32.mrb[0].mxu0
    %v1273 = vadd.f32 0.0, %v1272
    %v1274 = vpop.f32.mrb[0].mxu0
    %1275 = vdwg.mxu0
    %v1276 = vadd.f32 %v895, %v1273
    %v1277 = vtanh.pop %v1276
    %v1279 = vsel %vm107, %v1277, 0
    %1281 = vmatprep.subr.mxu0 0.0
    %1282 = vmatpush1.msra.mxu0 %v814
    %1283 = vmatprep.subr.mxu0 0.0
    %1284 = vmatpush1.msra.mxu0 %v815
    %1285 = vmatprep.subr.mxu0 0.0
    %1286 = vmatpush1.msra.mxu0 %v816
    %1287 = vmatprep.subr.mxu0 0.0
    %1288 = vmatpush1.msra.mxu0 %v817
    %1289 = vmatprep.subr.mxu0 0.0
    %1290 = vmatpush1.msra.mxu0 0.0
    %1291 = vmatprep.subr.mxu0 0.0
    %1292 = vmatpush1.msra.mxu0 0.0
    %1293 = vmatprep.subr.mxu0 0.0
    %1294 = vmatpush1.msra.mxu0 0.0
    %1295 = vmatprep.subr.mxu0 0.0
    %1296 = vmatpush1.msra.mxu0 0.0
    %1297 = vmatprep.subr.mxu0 0.0
    %1298 = vmatpush1.msra.mxu0 0.0
    %1299 = vmatprep.subr.mxu0 0.0
    %1300 = vmatpush1.msra.mxu0 0.0
    %1301 = vmatprep.subr.mxu0 0.0
    %1302 = vmatpush1.msra.mxu0 0.0
    %1303 = vmatprep.subr.mxu0 0.0
    %1304 = vmatpush1.msra.mxu0 0.0
    %1305 = vmatprep.subr.mxu0 0.0
    %1306 = vmatpush1.msra.mxu0 0.0
    %1307 = vmatprep.subr.mxu0 0.0
    %1308 = vmatpush1.msra.mxu0 0.0
    %1309 = vmatprep.subr.mxu0 0.0
    %1310 = vmatpush1.msra.mxu0 0.0
    %1311 = vmatprep.subr.mxu0 0.0
    %1312 = vmatpush1.msra.mxu0 0.0
    %1313 = vmatprep.subr.mxu0 0.0
    %1314 = vmatpush1.msra.mxu0 0.0
    %1315 = vmatprep.subr.mxu0 0.0
    %1316 = vmatpush1.msra.mxu0 0.0
    %1317 = vmatprep.subr.mxu0 0.0
    %1318 = vmatpush1.msra.mxu0 0.0
    %1319 = vmatprep.subr.mxu0 0.0
    %1320 = vmatpush1.msra.mxu0 0.0
    %1321 = vmatprep.subr.mxu0 0.0
    %1322 = vmatpush1.msra.mxu0 0.0
    %1323 = vmatprep.subr.mxu0 0.0
    %1324 = vmatpush1.msra.mxu0 0.0
    %1325 = vmatprep.subr.mxu0 0.0
    %1326 = vmatpush1.msra.mxu0 0.0
    %1327 = vmatprep.subr.mxu0 0.0
    %1328 = vmatpush1.msra.mxu0 0.0
    %1329 = vmatprep.subr.mxu0 0.0
    %1330 = vmatpush1.msra.mxu0 0.0
    %1331 = vmatprep.subr.mxu0 0.0
    %1332 = vmatpush1.msra.mxu0 0.0
    %1333 = vmatprep.subr.mxu0 0.0
    %1334 = vmatpush1.msra.mxu0 0.0
    %1335 = vmatprep.subr.mxu0 0.0
    %1336 = vmatpush1.msra.mxu0 0.0
    %1337 = vmatprep.subr.mxu0 0.0
    %1338 = vmatpush1.msra.mxu0 0.0
    %1339 = vmatprep.subr.mxu0 0.0
    %1340 = vmatpush1.msra.mxu0 0.0
    %1341 = vmatprep.subr.mxu0 0.0
    %1342 = vmatpush1.msra.mxu0 0.0
    %1343 = vmatprep.subr.mxu0 0.0
    %1344 = vmatpush1.msra.mxu0 0.0
    %1345 = vmatprep.mubr.f32.mxu0 0.0
    %1346 = vmatmul.mubr.f32.gmra.mrb[0].mxu0 %v1279
    %v1347 = vpop.f32.mrb[0].mxu0
    %v1348 = vadd.f32 0.0, %v1347
    %v1349 = vpop.f32.mrb[0].mxu0
    %1350 = vdwg.mxu0
    %v1352 = vrot.slane %v1348, 7
    %v1354 = vadd.f32 %v895, %v1352
    %v1355 = vtanh.pop %v1354
    %v1357 = vrot.slane %v1355, 1
    %v1358 = vsel %vm107, %v1357, 0
    %1360 = vmatprep.subr.mxu0 0.0
    %1361 = vmatpush1.msra.mxu0 %v814
    %1362 = vmatprep.subr.mxu0 0.0
    %1363 = vmatpush1.msra.mxu0 %v815
    %1364 = vmatprep.subr.mxu0 0.0
    %1365 = vmatpush1.msra.mxu0 %v816
    %1366 = vmatprep.subr.mxu0 0.0
    %1367 = vmatpush1.msra.mxu0 %v817
    %1368 = vmatprep.subr.mxu0 0.0
    %1369 = vmatpush1.msra.mxu0 0.0
    %1370 = vmatprep.subr.mxu0 0.0
    %1371 = vmatpush1.msra.mxu0 0.0
    %1372 = vmatprep.subr.mxu0 0.0
    %1373 = vmatpush1.msra.mxu0 0.0
    %1374 = vmatprep.subr.mxu0 0.0
    %1375 = vmatpush1.msra.mxu0 0.0
    %1376 = vmatprep.subr.mxu0 0.0
    %1377 = vmatpush1.msra.mxu0 0.0
    %1378 = vmatprep.subr.mxu0 0.0
    %1379 = vmatpush1.msra.mxu0 0.0
    %1380 = vmatprep.subr.mxu0 0.0
    %1381 = vmatpush1.msra.mxu0 0.0
    %1382 = vmatprep.subr.mxu0 0.0
    %1383 = vmatpush1.msra.mxu0 0.0
    %1384 = vmatprep.subr.mxu0 0.0
    %1385 = vmatpush1.msra.mxu0 0.0
    %1386 = vmatprep.subr.mxu0 0.0
    %1387 = vmatpush1.msra.mxu0 0.0
    %1388 = vmatprep.subr.mxu0 0.0
    %1389 = vmatpush1.msra.mxu0 0.0
    %1390 = vmatprep.subr.mxu0 0.0
    %1391 = vmatpush1.msra.mxu0 0.0
    %1392 = vmatprep.subr.mxu0 0.0
    %1393 = vmatpush1.msra.mxu0 0.0
    %1394 = vmatprep.subr.mxu0 0.0
    %1395 = vmatpush1.msra.mxu0 0.0
    %1396 = vmatprep.subr.mxu0 0.0
    %1397 = vmatpush1.msra.mxu0 0.0
    %1398 = vmatprep.subr.mxu0 0.0
    %1399 = vmatpush1.msra.mxu0 0.0
    %1400 = vmatprep.subr.mxu0 0.0
    %1401 = vmatpush1.msra.mxu0 0.0
    %1402 = vmatprep.subr.mxu0 0.0
    %1403 = vmatpush1.msra.mxu0 0.0
    %1404 = vmatprep.subr.mxu0 0.0
    %1405 = vmatpush1.msra.mxu0 0.0
    %1406 = vmatprep.subr.mxu0 0.0
    %1407 = vmatpush1.msra.mxu0 0.0
    %1408 = vmatprep.subr.mxu0 0.0
    %1409 = vmatpush1.msra.mxu0 0.0
    %1410 = vmatprep.subr.mxu0 0.0
    %1411 = vmatpush1.msra.mxu0 0.0
    %1412 = vmatprep.subr.mxu0 0.0
    %1413 = vmatpush1.msra.mxu0 0.0
    %1414 = vmatprep.subr.mxu0 0.0
    %1415 = vmatpush1.msra.mxu0 0.0
    %1416 = vmatprep.subr.mxu0 0.0
    %1417 = vmatpush1.msra.mxu0 0.0
    %1418 = vmatprep.subr.mxu0 0.0
    %1419 = vmatpush1.msra.mxu0 0.0
    %1420 = vmatprep.subr.mxu0 0.0
    %1421 = vmatpush1.msra.mxu0 0.0
    %1422 = vmatprep.subr.mxu0 0.0
    %1423 = vmatpush1.msra.mxu0 0.0
    %1424 = vmatprep.mubr.f32.mxu0 0.0
    %1425 = vmatmul.mubr.f32.gmra.mrb[0].mxu0 %v1358
    %v1426 = vpop.f32.mrb[0].mxu0
    %v1427 = vadd.f32 0.0, %v1426
    %v1428 = vpop.f32.mrb[0].mxu0
    %1429 = vdwg.mxu0
    %v1430 = vadd.f32 %v895, %v1427
    %v1431 = vtanh.pop %v1430
    %v1433 = vsel %vm107, %v1431, 0
    %1435 = vmatprep.subr.mxu0 0.0
    %1436 = vmatpush1.msra.mxu0 %v814
    %1437 = vmatprep.subr.mxu0 0.0
    %1438 = vmatpush1.msra.mxu0 %v815
    %1439 = vmatprep.subr.mxu0 0.0
    %1440 = vmatpush1.msra.mxu0 %v816
    %1441 = vmatprep.subr.mxu0 0.0
    %1442 = vmatpush1.msra.mxu0 %v817
    %1443 = vmatprep.subr.mxu0 0.0
    %1444 = vmatpush1.msra.mxu0 0.0
    %1445 = vmatprep.subr.mxu0 0.0
    %1446 = vmatpush1.msra.mxu0 0.0
    %1447 = vmatprep.subr.mxu0 0.0
    %1448 = vmatpush1.msra.mxu0 0.0
    %1449 = vmatprep.subr.mxu0 0.0
    %1450 = vmatpush1.msra.mxu0 0.0
    %1451 = vmatprep.subr.mxu0 0.0
    %1452 = vmatpush1.msra.mxu0 0.0
    %1453 = vmatprep.subr.mxu0 0.0
    %1454 = vmatpush1.msra.mxu0 0.0
    %1455 = vmatprep.subr.mxu0 0.0
    %1456 = vmatpush1.msra.mxu0 0.0
    %1457 = vmatprep.subr.mxu0 0.0
    %1458 = vmatpush1.msra.mxu0 0.0
    %1459 = vmatprep.subr.mxu0 0.0
    %1460 = vmatpush1.msra.mxu0 0.0
    %1461 = vmatprep.subr.mxu0 0.0
    %1462 = vmatpush1.msra.mxu0 0.0
    %1463 = vmatprep.subr.mxu0 0.0
    %1464 = vmatpush1.msra.mxu0 0.0
    %1465 = vmatprep.subr.mxu0 0.0
    %1466 = vmatpush1.msra.mxu0 0.0
    %1467 = vmatprep.subr.mxu0 0.0
    %1468 = vmatpush1.msra.mxu0 0.0
    %1469 = vmatprep.subr.mxu0 0.0
    %1470 = vmatpush1.msra.mxu0 0.0
    %1471 = vmatprep.subr.mxu0 0.0
    %1472 = vmatpush1.msra.mxu0 0.0
    %1473 = vmatprep.subr.mxu0 0.0
    %1474 = vmatpush1.msra.mxu0 0.0
    %1475 = vmatprep.subr.mxu0 0.0
    %1476 = vmatpush1.msra.mxu0 0.0
    %1477 = vmatprep.subr.mxu0 0.0
    %1478 = vmatpush1.msra.mxu0 0.0
    %1479 = vmatprep.subr.mxu0 0.0
    %1480 = vmatpush1.msra.mxu0 0.0
    %1481 = vmatprep.subr.mxu0 0.0
    %1482 = vmatpush1.msra.mxu0 0.0
    %1483 = vmatprep.subr.mxu0 0.0
    %1484 = vmatpush1.msra.mxu0 0.0
    %1485 = vmatprep.subr.mxu0 0.0
    %1486 = vmatpush1.msra.mxu0 0.0
    %1487 = vmatprep.subr.mxu0 0.0
    %1488 = vmatpush1.msra.mxu0 0.0
    %1489 = vmatprep.subr.mxu0 0.0
    %1490 = vmatpush1.msra.mxu0 0.0
    %1491 = vmatprep.subr.mxu0 0.0
    %1492 = vmatpush1.msra.mxu0 0.0
    %1493 = vmatprep.subr.mxu0 0.0
    %1494 = vmatpush1.msra.mxu0 0.0
    %1495 = vmatprep.subr.mxu0 0.0
    %1496 = vmatpush1.msra.mxu0 0.0
    %1497 = vmatprep.subr.mxu0 0.0
    %1498 = vmatpush1.msra.mxu0 0.0
    %1499 = vmatprep.mubr.f32.mxu0 0.0
    %1500 = vmatmul.mubr.f32.gmra.mrb[0].mxu0 %v1433
    %v1501 = vpop.f32.mrb[0].mxu0
    %v1502 = vadd.f32 0.0, %v1501
    %v1503 = vpop.f32.mrb[0].mxu0
    %1504 = vdwg.mxu0
    %v1506 = vrot.slane %v1502, 7
    %v1508 = vadd.f32 %v895, %v1506
    %v1509 = vtanh.pop %v1508
    %v1511 = vrot.slane %v1509, 1
    %v1512 = vsel %vm107, %v1511, 0
    %1514 = vmatprep.subr.mxu0 0.0
    %1515 = vmatpush1.msra.mxu0 %v814
    %1516 = vmatprep.subr.mxu0 0.0
    %1517 = vmatpush1.msra.mxu0 %v815
    %1518 = vmatprep.subr.mxu0 0.0
    %1519 = vmatpush1.msra.mxu0 %v816
    %1520 = vmatprep.subr.mxu0 0.0
    %1521 = vmatpush1.msra.mxu0 %v817
    %1522 = vmatprep.subr.mxu0 0.0
    %1523 = vmatpush1.msra.mxu0 0.0
    %1524 = vmatprep.subr.mxu0 0.0
    %1525 = vmatpush1.msra.mxu0 0.0
    %1526 = vmatprep.subr.mxu0 0.0
    %1527 = vmatpush1.msra.mxu0 0.0
    %1528 = vmatprep.subr.mxu0 0.0
    %1529 = vmatpush1.msra.mxu0 0.0
    %1530 = vmatprep.subr.mxu0 0.0
    %1531 = vmatpush1.msra.mxu0 0.0
    %1532 = vmatprep.subr.mxu0 0.0
    %1533 = vmatpush1.msra.mxu0 0.0
    %1534 = vmatprep.subr.mxu0 0.0
    %1535 = vmatpush1.msra.mxu0 0.0
    %1536 = vmatprep.subr.mxu0 0.0
    %1537 = vmatpush1.msra.mxu0 0.0
    %1538 = vmatprep.subr.mxu0 0.0
    %1539 = vmatpush1.msra.mxu0 0.0
    %1540 = vmatprep.subr.mxu0 0.0
    %1541 = vmatpush1.msra.mxu0 0.0
    %1542 = vmatprep.subr.mxu0 0.0
    %1543 = vmatpush1.msra.mxu0 0.0
    %1544 = vmatprep.subr.mxu0 0.0
    %1545 = vmatpush1.msra.mxu0 0.0
    %1546 = vmatprep.subr.mxu0 0.0
    %1547 = vmatpush1.msra.mxu0 0.0
    %1548 = vmatprep.subr.mxu0 0.0
    %1549 = vmatpush1.msra.mxu0 0.0
    %1550 = vmatprep.subr.mxu0 0.0
    %1551 = vmatpush1.msra.mxu0 0.0
    %1552 = vmatprep.subr.mxu0 0.0
    %1553 = vmatpush1.msra.mxu0 0.0
    %1554 = vmatprep.subr.mxu0 0.0
    %1555 = vmatpush1.msra.mxu0 0.0
    %1556 = vmatprep.subr.mxu0 0.0
    %1557 = vmatpush1.msra.mxu0 0.0
    %1558 = vmatprep.subr.mxu0 0.0
    %1559 = vmatpush1.msra.mxu0 0.0
    %1560 = vmatprep.subr.mxu0 0.0
    %1561 = vmatpush1.msra.mxu0 0.0
    %1562 = vmatprep.subr.mxu0 0.0
    %1563 = vmatpush1.msra.mxu0 0.0
    %1564 = vmatprep.subr.mxu0 0.0
    %1565 = vmatpush1.msra.mxu0 0.0
    %1566 = vmatprep.subr.mxu0 0.0
    %1567 = vmatpush1.msra.mxu0 0.0
    %1568 = vmatprep.subr.mxu0 0.0
    %1569 = vmatpush1.msra.mxu0 0.0
    %1570 = vmatprep.subr.mxu0 0.0
    %1571 = vmatpush1.msra.mxu0 0.0
    %1572 = vmatprep.subr.mxu0 0.0
    %1573 = vmatpush1.msra.mxu0 0.0
    %1574 = vmatprep.subr.mxu0 0.0
    %1575 = vmatpush1.msra.mxu0 0.0
    %1576 = vmatprep.subr.mxu0 0.0
    %1577 = vmatpush1.msra.mxu0 0.0
    %1578 = vmatprep.mubr.f32.mxu0 0.0
    %1579 = vmatmul.mubr.f32.gmra.mrb[0].mxu0 %v1512
    %v1580 = vpop.f32.mrb[0].mxu0
    %v1581 = vadd.f32 0.0, %v1580
    %v1582 = vpop.f32.mrb[0].mxu0
    %1583 = vdwg.mxu0
    %v1584 = vadd.f32 %v895, %v1581
    %v1585 = vtanh.pop %v1584
    %v1587 = vsel %vm107, %v1585, 0
    %1589 = vmatprep.subr.mxu0 0.0
    %1590 = vmatpush1.msra.mxu0 %v814
    %1591 = vmatprep.subr.mxu0 0.0
    %1592 = vmatpush1.msra.mxu0 %v815
    %1593 = vmatprep.subr.mxu0 0.0
    %1594 = vmatpush1.msra.mxu0 %v816
    %1595 = vmatprep.subr.mxu0 0.0
    %1596 = vmatpush1.msra.mxu0 %v817
    %1597 = vmatprep.subr.mxu0 0.0
    %1598 = vmatpush1.msra.mxu0 0.0
    %1599 = vmatprep.subr.mxu0 0.0
    %1600 = vmatpush1.msra.mxu0 0.0
    %1601 = vmatprep.subr.mxu0 0.0
    %1602 = vmatpush1.msra.mxu0 0.0
    %1603 = vmatprep.subr.mxu0 0.0
    %1604 = vmatpush1.msra.mxu0 0.0
    %1605 = vmatprep.subr.mxu0 0.0
    %1606 = vmatpush1.msra.mxu0 0.0
    %1607 = vmatprep.subr.mxu0 0.0
    %1608 = vmatpush1.msra.mxu0 0.0
    %1609 = vmatprep.subr.mxu0 0.0
    %1610 = vmatpush1.msra.mxu0 0.0
    %1611 = vmatprep.subr.mxu0 0.0
    %1612 = vmatpush1.msra.mxu0 0.0
    %1613 = vmatprep.subr.mxu0 0.0
    %1614 = vmatpush1.msra.mxu0 0.0
    %1615 = vmatprep.subr.mxu0 0.0
    %1616 = vmatpush1.msra.mxu0 0.0
    %1617 = vmatprep.subr.mxu0 0.0
    %1618 = vmatpush1.msra.mxu0 0.0
    %1619 = vmatprep.subr.mxu0 0.0
    %1620 = vmatpush1.msra.mxu0 0.0
    %1621 = vmatprep.subr.mxu0 0.0
    %1622 = vmatpush1.msra.mxu0 0.0
    %1623 = vmatprep.subr.mxu0 0.0
    %1624 = vmatpush1.msra.mxu0 0.0
    %1625 = vmatprep.subr.mxu0 0.0
    %1626 = vmatpush1.msra.mxu0 0.0
    %1627 = vmatprep.subr.mxu0 0.0
    %1628 = vmatpush1.msra.mxu0 0.0
    %1629 = vmatprep.subr.mxu0 0.0
    %1630 = vmatpush1.msra.mxu0 0.0
    %1631 = vmatprep.subr.mxu0 0.0
    %1632 = vmatpush1.msra.mxu0 0.0
    %1633 = vmatprep.subr.mxu0 0.0
    %1634 = vmatpush1.msra.mxu0 0.0
    %1635 = vmatprep.subr.mxu0 0.0
    %1636 = vmatpush1.msra.mxu0 0.0
    %1637 = vmatprep.subr.mxu0 0.0
    %1638 = vmatpush1.msra.mxu0 0.0
    %1639 = vmatprep.subr.mxu0 0.0
    %1640 = vmatpush1.msra.mxu0 0.0
    %1641 = vmatprep.subr.mxu0 0.0
    %1642 = vmatpush1.msra.mxu0 0.0
    %1643 = vmatprep.subr.mxu0 0.0
    %1644 = vmatpush1.msra.mxu0 0.0
    %1645 = vmatprep.subr.mxu0 0.0
    %1646 = vmatpush1.msra.mxu0 0.0
    %1647 = vmatprep.subr.mxu0 0.0
    %1648 = vmatpush1.msra.mxu0 0.0
    %1649 = vmatprep.subr.mxu0 0.0
    %1650 = vmatpush1.msra.mxu0 0.0
    %1651 = vmatprep.subr.mxu0 0.0
    %1652 = vmatpush1.msra.mxu0 0.0
    %1653 = vmatprep.mubr.f32.mxu0 0.0
    %1654 = vmatmul.mubr.f32.gmra.mrb[0].mxu0 %v1587
    %v1655 = vpop.f32.mrb[0].mxu0
    %v1656 = vadd.f32 0.0, %v1655
    %v1657 = vpop.f32.mrb[0].mxu0
    %1658 = vdwg.mxu0
    %v1660 = vrot.slane %v1656, 7
    %v1662 = vadd.f32 %v895, %v1660
    %v1663 = vtanh.pop %v1662
    %v1665 = vrot.slane %v1663, 1
    %v1666 = vsel %vm107, %v1665, 0
    %1668 = vmatprep.subr.mxu0 0.0
    %1669 = vmatpush1.msra.mxu0 %v814
    %1670 = vmatprep.subr.mxu0 0.0
    %1671 = vmatpush1.msra.mxu0 %v815
    %1672 = vmatprep.subr.mxu0 0.0
    %1673 = vmatpush1.msra.mxu0 %v816
    %1674 = vmatprep.subr.mxu0 0.0
    %1675 = vmatpush1.msra.mxu0 %v817
    %1676 = vmatprep.subr.mxu0 0.0
    %1677 = vmatpush1.msra.mxu0 0.0
    %1678 = vmatprep.subr.mxu0 0.0
    %1679 = vmatpush1.msra.mxu0 0.0
    %1680 = vmatprep.subr.mxu0 0.0
    %1681 = vmatpush1.msra.mxu0 0.0
    %1682 = vmatprep.subr.mxu0 0.0
    %1683 = vmatpush1.msra.mxu0 0.0
    %1684 = vmatprep.subr.mxu0 0.0
    %1685 = vmatpush1.msra.mxu0 0.0
    %1686 = vmatprep.subr.mxu0 0.0
    %1687 = vmatpush1.msra.mxu0 0.0
    %1688 = vmatprep.subr.mxu0 0.0
    %1689 = vmatpush1.msra.mxu0 0.0
    %1690 = vmatprep.subr.mxu0 0.0
    %1691 = vmatpush1.msra.mxu0 0.0
    %1692 = vmatprep.subr.mxu0 0.0
    %1693 = vmatpush1.msra.mxu0 0.0
    %1694 = vmatprep.subr.mxu0 0.0
    %1695 = vmatpush1.msra.mxu0 0.0
    %1696 = vmatprep.subr.mxu0 0.0
    %1697 = vmatpush1.msra.mxu0 0.0
    %1698 = vmatprep.subr.mxu0 0.0
    %1699 = vmatpush1.msra.mxu0 0.0
    %1700 = vmatprep.subr.mxu0 0.0
    %1701 = vmatpush1.msra.mxu0 0.0
    %1702 = vmatprep.subr.mxu0 0.0
    %1703 = vmatpush1.msra.mxu0 0.0
    %1704 = vmatprep.subr.mxu0 0.0
    %1705 = vmatpush1.msra.mxu0 0.0
    %1706 = vmatprep.subr.mxu0 0.0
    %1707 = vmatpush1.msra.mxu0 0.0
    %1708 = vmatprep.subr.mxu0 0.0
    %1709 = vmatpush1.msra.mxu0 0.0
    %1710 = vmatprep.subr.mxu0 0.0
    %1711 = vmatpush1.msra.mxu0 0.0
    %1712 = vmatprep.subr.mxu0 0.0
    %1713 = vmatpush1.msra.mxu0 0.0
    %1714 = vmatprep.subr.mxu0 0.0
    %1715 = vmatpush1.msra.mxu0 0.0
    %1716 = vmatprep.subr.mxu0 0.0
    %1717 = vmatpush1.msra.mxu0 0.0
    %1718 = vmatprep.subr.mxu0 0.0
    %1719 = vmatpush1.msra.mxu0 0.0
    %1720 = vmatprep.subr.mxu0 0.0
    %1721 = vmatpush1.msra.mxu0 0.0
    %1722 = vmatprep.subr.mxu0 0.0
    %1723 = vmatpush1.msra.mxu0 0.0
    %1724 = vmatprep.subr.mxu0 0.0
    %1725 = vmatpush1.msra.mxu0 0.0
    %1726 = vmatprep.subr.mxu0 0.0
    %1727 = vmatpush1.msra.mxu0 0.0
    %1728 = vmatprep.subr.mxu0 0.0
    %1729 = vmatpush1.msra.mxu0 0.0
    %1730 = vmatprep.subr.mxu0 0.0
    %1731 = vmatpush1.msra.mxu0 0.0
    %1732 = vmatprep.mubr.f32.mxu0 0.0
    %1733 = vmatmul.mubr.f32.gmra.mrb[0].mxu0 %v1666
    %v1734 = vpop.f32.mrb[0].mxu0
    %v1735 = vadd.f32 0.0, %v1734
    %v1736 = vpop.f32.mrb[0].mxu0
    %1737 = vdwg.mxu0
    %v1738 = vadd.f32 %v895, %v1735
    %v1739 = vtanh.pop %v1738
    %v1741 = vsel %vm107, %v1739, 0
    %1743 = vmatprep.subr.mxu0 0.0
    %1744 = vmatpush1.msra.mxu0 %v814
    %1745 = vmatprep.subr.mxu0 0.0
    %1746 = vmatpush1.msra.mxu0 %v815
    %1747 = vmatprep.subr.mxu0 0.0
    %1748 = vmatpush1.msra.mxu0 %v816
    %1749 = vmatprep.subr.mxu0 0.0
    %1750 = vmatpush1.msra.mxu0 %v817
    %1751 = vmatprep.subr.mxu0 0.0
    %1752 = vmatpush1.msra.mxu0 0.0
    %1753 = vmatprep.subr.mxu0 0.0
    %1754 = vmatpush1.msra.mxu0 0.0
    %1755 = vmatprep.subr.mxu0 0.0
    %1756 = vmatpush1.msra.mxu0 0.0
    %1757 = vmatprep.subr.mxu0 0.0
    %1758 = vmatpush1.msra.mxu0 0.0
    %1759 = vmatprep.subr.mxu0 0.0
    %1760 = vmatpush1.msra.mxu0 0.0
    %1761 = vmatprep.subr.mxu0 0.0
    %1762 = vmatpush1.msra.mxu0 0.0
    %1763 = vmatprep.subr.mxu0 0.0
    %1764 = vmatpush1.msra.mxu0 0.0
    %1765 = vmatprep.subr.mxu0 0.0
    %1766 = vmatpush1.msra.mxu0 0.0
    %1767 = vmatprep.subr.mxu0 0.0
    %1768 = vmatpush1.msra.mxu0 0.0
    %1769 = vmatprep.subr.mxu0 0.0
    %1770 = vmatpush1.msra.mxu0 0.0
    %1771 = vmatprep.subr.mxu0 0.0
    %1772 = vmatpush1.msra.mxu0 0.0
    %1773 = vmatprep.subr.mxu0 0.0
    %1774 = vmatpush1.msra.mxu0 0.0
    %1775 = vmatprep.subr.mxu0 0.0
    %1776 = vmatpush1.msra.mxu0 0.0
    %1777 = vmatprep.subr.mxu0 0.0
    %1778 = vmatpush1.msra.mxu0 0.0
    %1779 = vmatprep.subr.mxu0 0.0
    %1780 = vmatpush1.msra.mxu0 0.0
    %1781 = vmatprep.subr.mxu0 0.0
    %1782 = vmatpush1.msra.mxu0 0.0
    %1783 = vmatprep.subr.mxu0 0.0
    %1784 = vmatpush1.msra.mxu0 0.0
    %1785 = vmatprep.subr.mxu0 0.0
    %1786 = vmatpush1.msra.mxu0 0.0
    %1787 = vmatprep.subr.mxu0 0.0
    %1788 = vmatpush1.msra.mxu0 0.0
    %1789 = vmatprep.subr.mxu0 0.0
    %1790 = vmatpush1.msra.mxu0 0.0
    %1791 = vmatprep.subr.mxu0 0.0
    %1792 = vmatpush1.msra.mxu0 0.0
    %1793 = vmatprep.subr.mxu0 0.0
    %1794 = vmatpush1.msra.mxu0 0.0
    %1795 = vmatprep.subr.mxu0 0.0
    %1796 = vmatpush1.msra.mxu0 0.0
    %1797 = vmatprep.subr.mxu0 0.0
    %1798 = vmatpush1.msra.mxu0 0.0
    %1799 = vmatprep.subr.mxu0 0.0
    %1800 = vmatpush1.msra.mxu0 0.0
    %1801 = vmatprep.subr.mxu0 0.0
    %1802 = vmatpush1.msra.mxu0 0.0
    %1803 = vmatprep.subr.mxu0 0.0
    %1804 = vmatpush1.msra.mxu0 0.0
    %1805 = vmatprep.subr.mxu0 0.0
    %1806 = vmatpush1.msra.mxu0 0.0
    %1807 = vmatprep.mubr.f32.mxu0 0.0
    %1808 = vmatmul.mubr.f32.gmra.mrb[0].mxu0 %v1741
    %v1809 = vpop.f32.mrb[0].mxu0
    %v1810 = vadd.f32 0.0, %v1809
    %v1811 = vpop.f32.mrb[0].mxu0
    %1812 = vdwg.mxu0
    %v1814 = vrot.slane %v1810, 7
    %v1816 = vadd.f32 %v895, %v1814
    %v1817 = vtanh.pop %v1816
    %v1819 = vrot.slane %v1817, 1
    %v1820 = vsel %vm107, %v1819, 0
    %1822 = vmatprep.subr.mxu0 0.0
    %1823 = vmatpush1.msra.mxu0 %v814
    %1824 = vmatprep.subr.mxu0 0.0
    %1825 = vmatpush1.msra.mxu0 %v815
    %1826 = vmatprep.subr.mxu0 0.0
    %1827 = vmatpush1.msra.mxu0 %v816
    %1828 = vmatprep.subr.mxu0 0.0
    %1829 = vmatpush1.msra.mxu0 %v817
    %1830 = vmatprep.subr.mxu0 0.0
    %1831 = vmatpush1.msra.mxu0 0.0
    %1832 = vmatprep.subr.mxu0 0.0
    %1833 = vmatpush1.msra.mxu0 0.0
    %1834 = vmatprep.subr.mxu0 0.0
    %1835 = vmatpush1.msra.mxu0 0.0
    %1836 = vmatprep.subr.mxu0 0.0
    %1837 = vmatpush1.msra.mxu0 0.0
    %1838 = vmatprep.subr.mxu0 0.0
    %1839 = vmatpush1.msra.mxu0 0.0
    %1840 = vmatprep.subr.mxu0 0.0
    %1841 = vmatpush1.msra.mxu0 0.0
    %1842 = vmatprep.subr.mxu0 0.0
    %1843 = vmatpush1.msra.mxu0 0.0
    %1844 = vmatprep.subr.mxu0 0.0
    %1845 = vmatpush1.msra.mxu0 0.0
    %1846 = vmatprep.subr.mxu0 0.0
    %1847 = vmatpush1.msra.mxu0 0.0
    %1848 = vmatprep.subr.mxu0 0.0
    %1849 = vmatpush1.msra.mxu0 0.0
    %1850 = vmatprep.subr.mxu0 0.0
    %1851 = vmatpush1.msra.mxu0 0.0
    %1852 = vmatprep.subr.mxu0 0.0
    %1853 = vmatpush1.msra.mxu0 0.0
    %1854 = vmatprep.subr.mxu0 0.0
    %1855 = vmatpush1.msra.mxu0 0.0
    %1856 = vmatprep.subr.mxu0 0.0
    %1857 = vmatpush1.msra.mxu0 0.0
    %1858 = vmatprep.subr.mxu0 0.0
    %1859 = vmatpush1.msra.mxu0 0.0
    %1860 = vmatprep.subr.mxu0 0.0
    %1861 = vmatpush1.msra.mxu0 0.0
    %1862 = vmatprep.subr.mxu0 0.0
    %1863 = vmatpush1.msra.mxu0 0.0
    %1864 = vmatprep.subr.mxu0 0.0
    %1865 = vmatpush1.msra.mxu0 0.0
    %1866 = vmatprep.subr.mxu0 0.0
    %1867 = vmatpush1.msra.mxu0 0.0
    %1868 = vmatprep.subr.mxu0 0.0
    %1869 = vmatpush1.msra.mxu0 0.0
    %1870 = vmatprep.subr.mxu0 0.0
    %1871 = vmatpush1.msra.mxu0 0.0
    %1872 = vmatprep.subr.mxu0 0.0
    %1873 = vmatpush1.msra.mxu0 0.0
    %1874 = vmatprep.subr.mxu0 0.0
    %1875 = vmatpush1.msra.mxu0 0.0
    %1876 = vmatprep.subr.mxu0 0.0
    %1877 = vmatpush1.msra.mxu0 0.0
    %1878 = vmatprep.subr.mxu0 0.0
    %1879 = vmatpush1.msra.mxu0 0.0
    %1880 = vmatprep.subr.mxu0 0.0
    %1881 = vmatpush1.msra.mxu0 0.0
    %1882 = vmatprep.subr.mxu0 0.0
    %1883 = vmatpush1.msra.mxu0 0.0
    %1884 = vmatprep.subr.mxu0 0.0
    %1885 = vmatpush1.msra.mxu0 0.0
    %1886 = vmatprep.mubr.f32.mxu0 0.0
    %1887 = vmatmul.mubr.f32.gmra.mrb[0].mxu0 %v1820
    %v1888 = vpop.f32.mrb[0].mxu0
    %v1889 = vadd.f32 0.0, %v1888
    %v1890 = vpop.f32.mrb[0].mxu0
    %1891 = vdwg.mxu0
    %v1892 = vadd.f32 %v895, %v1889
    %v1893 = vtanh.pop %v1892
    %v1895 = vsel %vm107, %v1893, 0
    %1897 = vmatprep.subr.mxu0 0.0
    %1898 = vmatpush1.msra.mxu0 %v814
    %1899 = vmatprep.subr.mxu0 0.0
    %1900 = vmatpush1.msra.mxu0 %v815
    %1901 = vmatprep.subr.mxu0 0.0
    %1902 = vmatpush1.msra.mxu0 %v816
    %1903 = vmatprep.subr.mxu0 0.0
    %1904 = vmatpush1.msra.mxu0 %v817
    %1905 = vmatprep.subr.mxu0 0.0
    %1906 = vmatpush1.msra.mxu0 0.0
    %1907 = vmatprep.subr.mxu0 0.0
    %1908 = vmatpush1.msra.mxu0 0.0
    %1909 = vmatprep.subr.mxu0 0.0
    %1910 = vmatpush1.msra.mxu0 0.0
    %1911 = vmatprep.subr.mxu0 0.0
    %1912 = vmatpush1.msra.mxu0 0.0
    %1913 = vmatprep.subr.mxu0 0.0
    %1914 = vmatpush1.msra.mxu0 0.0
    %1915 = vmatprep.subr.mxu0 0.0
    %1916 = vmatpush1.msra.mxu0 0.0
    %1917 = vmatprep.subr.mxu0 0.0
    %1918 = vmatpush1.msra.mxu0 0.0
    %1919 = vmatprep.subr.mxu0 0.0
    %1920 = vmatpush1.msra.mxu0 0.0
    %1921 = vmatprep.subr.mxu0 0.0
    %1922 = vmatpush1.msra.mxu0 0.0
    %1923 = vmatprep.subr.mxu0 0.0
    %1924 = vmatpush1.msra.mxu0 0.0
    %1925 = vmatprep.subr.mxu0 0.0
    %1926 = vmatpush1.msra.mxu0 0.0
    %1927 = vmatprep.subr.mxu0 0.0
    %1928 = vmatpush1.msra.mxu0 0.0
    %1929 = vmatprep.subr.mxu0 0.0
    %1930 = vmatpush1.msra.mxu0 0.0
    %1931 = vmatprep.subr.mxu0 0.0
    %1932 = vmatpush1.msra.mxu0 0.0
    %1933 = vmatprep.subr.mxu0 0.0
    %1934 = vmatpush1.msra.mxu0 0.0
    %1935 = vmatprep.subr.mxu0 0.0
    %1936 = vmatpush1.msra.mxu0 0.0
    %1937 = vmatprep.subr.mxu0 0.0
    %1938 = vmatpush1.msra.mxu0 0.0
    %1939 = vmatprep.subr.mxu0 0.0
    %1940 = vmatpush1.msra.mxu0 0.0
    %1941 = vmatprep.subr.mxu0 0.0
    %1942 = vmatpush1.msra.mxu0 0.0
    %1943 = vmatprep.subr.mxu0 0.0
    %1944 = vmatpush1.msra.mxu0 0.0
    %1945 = vmatprep.subr.mxu0 0.0
    %1946 = vmatpush1.msra.mxu0 0.0
    %1947 = vmatprep.subr.mxu0 0.0
    %1948 = vmatpush1.msra.mxu0 0.0
    %1949 = vmatprep.subr.mxu0 0.0
    %1950 = vmatpush1.msra.mxu0 0.0
    %1951 = vmatprep.subr.mxu0 0.0
    %1952 = vmatpush1.msra.mxu0 0.0
    %1953 = vmatprep.subr.mxu0 0.0
    %1954 = vmatpush1.msra.mxu0 0.0
    %1955 = vmatprep.subr.mxu0 0.0
    %1956 = vmatpush1.msra.mxu0 0.0
    %1957 = vmatprep.subr.mxu0 0.0
    %1958 = vmatpush1.msra.mxu0 0.0
    %1959 = vmatprep.subr.mxu0 0.0
    %1960 = vmatpush1.msra.mxu0 0.0
    %1961 = vmatprep.mubr.f32.mxu0 0.0
    %1962 = vmatmul.mubr.f32.gmra.mrb[0].mxu0 %v1895
    %v1963 = vpop.f32.mrb[0].mxu0
    %v1964 = vadd.f32 0.0, %v1963
    %v1965 = vpop.f32.mrb[0].mxu0
    %1966 = vdwg.mxu0
    %v1968 = vrot.slane %v1964, 7
    %v1970 = vadd.f32 %v895, %v1968
    %v1971 = vtanh.pop %v1970
    %v1973 = vrot.slane %v1971, 1
    %v1974 = vsel %vm107, %v1973, 0
    %1976 = vmatprep.subr.mxu0 0.0
    %1977 = vmatpush1.msra.mxu0 %v814
    %1978 = vmatprep.subr.mxu0 0.0
    %1979 = vmatpush1.msra.mxu0 %v815
    %1980 = vmatprep.subr.mxu0 0.0
    %1981 = vmatpush1.msra.mxu0 %v816
    %1982 = vmatprep.subr.mxu0 0.0
    %1983 = vmatpush1.msra.mxu0 %v817
    %1984 = vmatprep.subr.mxu0 0.0
    %1985 = vmatpush1.msra.mxu0 0.0
    %1986 = vmatprep.subr.mxu0 0.0
    %1987 = vmatpush1.msra.mxu0 0.0
    %1988 = vmatprep.subr.mxu0 0.0
    %1989 = vmatpush1.msra.mxu0 0.0
    %1990 = vmatprep.subr.mxu0 0.0
    %1991 = vmatpush1.msra.mxu0 0.0
    %1992 = vmatprep.subr.mxu0 0.0
    %1993 = vmatpush1.msra.mxu0 0.0
    %1994 = vmatprep.subr.mxu0 0.0
    %1995 = vmatpush1.msra.mxu0 0.0
    %1996 = vmatprep.subr.mxu0 0.0
    %1997 = vmatpush1.msra.mxu0 0.0
    %1998 = vmatprep.subr.mxu0 0.0
    %1999 = vmatpush1.msra.mxu0 0.0
    %2000 = vmatprep.subr.mxu0 0.0
    %2001 = vmatpush1.msra.mxu0 0.0
    %2002 = vmatprep.subr.mxu0 0.0
    %2003 = vmatpush1.msra.mxu0 0.0
    %2004 = vmatprep.subr.mxu0 0.0
    %2005 = vmatpush1.msra.mxu0 0.0
    %2006 = vmatprep.subr.mxu0 0.0
    %2007 = vmatpush1.msra.mxu0 0.0
    %2008 = vmatprep.subr.mxu0 0.0
    %2009 = vmatpush1.msra.mxu0 0.0
    %2010 = vmatprep.subr.mxu0 0.0
    %2011 = vmatpush1.msra.mxu0 0.0
    %2012 = vmatprep.subr.mxu0 0.0
    %2013 = vmatpush1.msra.mxu0 0.0
    %2014 = vmatprep.subr.mxu0 0.0
    %2015 = vmatpush1.msra.mxu0 0.0
    %2016 = vmatprep.subr.mxu0 0.0
    %2017 = vmatpush1.msra.mxu0 0.0
    %2018 = vmatprep.subr.mxu0 0.0
    %2019 = vmatpush1.msra.mxu0 0.0
    %2020 = vmatprep.subr.mxu0 0.0
    %2021 = vmatpush1.msra.mxu0 0.0
    %2022 = vmatprep.subr.mxu0 0.0
    %2023 = vmatpush1.msra.mxu0 0.0
    %2024 = vmatprep.subr.mxu0 0.0
    %2025 = vmatpush1.msra.mxu0 0.0
    %2026 = vmatprep.subr.mxu0 0.0
    %2027 = vmatpush1.msra.mxu0 0.0
    %2028 = vmatprep.subr.mxu0 0.0
    %2029 = vmatpush1.msra.mxu0 0.0
    %2030 = vmatprep.subr.mxu0 0.0
    %2031 = vmatpush1.msra.mxu0 0.0
    %2032 = vmatprep.subr.mxu0 0.0
    %2033 = vmatpush1.msra.mxu0 0.0
    %2034 = vmatprep.subr.mxu0 0.0
    %2035 = vmatpush1.msra.mxu0 0.0
    %2036 = vmatprep.subr.mxu0 0.0
    %2037 = vmatpush1.msra.mxu0 0.0
    %2038 = vmatprep.subr.mxu0 0.0
    %2039 = vmatpush1.msra.mxu0 0.0
    %2040 = vmatprep.mubr.f32.mxu0 0.0
    %2041 = vmatmul.mubr.f32.gmra.mrb[0].mxu0 %v1974
    %v2042 = vpop.f32.mrb[0].mxu0
    %v2043 = vadd.f32 0.0, %v2042
    %v2044 = vpop.f32.mrb[0].mxu0
    %2045 = vdwg.mxu0
    %v2046 = vadd.f32 %v895, %v2043
    %v2047 = vtanh.pop %v2046
    %v2049 = vsel %vm107, %v2047, 0
    %2051 = vmatprep.subr.mxu0 0.0
    %2052 = vmatpush1.msra.mxu0 %v814
    %2053 = vmatprep.subr.mxu0 0.0
    %2054 = vmatpush1.msra.mxu0 %v815
    %2055 = vmatprep.subr.mxu0 0.0
    %2056 = vmatpush1.msra.mxu0 %v816
    %2057 = vmatprep.subr.mxu0 0.0
    %2058 = vmatpush1.msra.mxu0 %v817
    %2059 = vmatprep.subr.mxu0 0.0
    %2060 = vmatpush1.msra.mxu0 0.0
    %2061 = vmatprep.subr.mxu0 0.0
    %2062 = vmatpush1.msra.mxu0 0.0
    %2063 = vmatprep.subr.mxu0 0.0
    %2064 = vmatpush1.msra.mxu0 0.0
    %2065 = vmatprep.subr.mxu0 0.0
    %2066 = vmatpush1.msra.mxu0 0.0
    %2067 = vmatprep.subr.mxu0 0.0
    %2068 = vmatpush1.msra.mxu0 0.0
    %2069 = vmatprep.subr.mxu0 0.0
    %2070 = vmatpush1.msra.mxu0 0.0
    %2071 = vmatprep.subr.mxu0 0.0
    %2072 = vmatpush1.msra.mxu0 0.0
    %2073 = vmatprep.subr.mxu0 0.0
    %2074 = vmatpush1.msra.mxu0 0.0
    %2075 = vmatprep.subr.mxu0 0.0
    %2076 = vmatpush1.msra.mxu0 0.0
    %2077 = vmatprep.subr.mxu0 0.0
    %2078 = vmatpush1.msra.mxu0 0.0
    %2079 = vmatprep.subr.mxu0 0.0
    %2080 = vmatpush1.msra.mxu0 0.0
    %2081 = vmatprep.subr.mxu0 0.0
    %2082 = vmatpush1.msra.mxu0 0.0
    %2083 = vmatprep.subr.mxu0 0.0
    %2084 = vmatpush1.msra.mxu0 0.0
    %2085 = vmatprep.subr.mxu0 0.0
    %2086 = vmatpush1.msra.mxu0 0.0
    %2087 = vmatprep.subr.mxu0 0.0
    %2088 = vmatpush1.msra.mxu0 0.0
    %2089 = vmatprep.subr.mxu0 0.0
    %2090 = vmatpush1.msra.mxu0 0.0
    %2091 = vmatprep.subr.mxu0 0.0
    %2092 = vmatpush1.msra.mxu0 0.0
    %2093 = vmatprep.subr.mxu0 0.0
    %2094 = vmatpush1.msra.mxu0 0.0
    %2095 = vmatprep.subr.mxu0 0.0
    %2096 = vmatpush1.msra.mxu0 0.0
    %2097 = vmatprep.subr.mxu0 0.0
    %2098 = vmatpush1.msra.mxu0 0.0
    %2099 = vmatprep.subr.mxu0 0.0
    %2100 = vmatpush1.msra.mxu0 0.0
    %2101 = vmatprep.subr.mxu0 0.0
    %2102 = vmatpush1.msra.mxu0 0.0
    %2103 = vmatprep.subr.mxu0 0.0
    %2104 = vmatpush1.msra.mxu0 0.0
    %2105 = vmatprep.subr.mxu0 0.0
    %2106 = vmatpush1.msra.mxu0 0.0
    %2107 = vmatprep.subr.mxu0 0.0
    %2108 = vmatpush1.msra.mxu0 0.0
    %2109 = vmatprep.subr.mxu0 0.0
    %2110 = vmatpush1.msra.mxu0 0.0
    %2111 = vmatprep.subr.mxu0 0.0
    %2112 = vmatpush1.msra.mxu0 0.0
    %2113 = vmatprep.subr.mxu0 0.0
    %2114 = vmatpush1.msra.mxu0 0.0
    %2115 = vmatprep.mubr.f32.mxu0 0.0
    %2116 = vmatmul.mubr.f32.gmra.mrb[0].mxu0 %v2049
    %v2117 = vpop.f32.mrb[0].mxu0
    %v2118 = vadd.f32 0.0, %v2117
    %v2119 = vpop.f32.mrb[0].mxu0
    %2120 = vdwg.mxu0
    %v2122 = vrot.slane %v2118, 7
    %v2124 = vadd.f32 %v895, %v2122
    %v2125 = vtanh.pop %v2124
    %v2126 = vrot.slane %v1123, 6
    %v2128 = vrot.slane %v1201, 6
    %v2130 = vrot.slane %v1277, 4
    %v2132 = vrot.slane %v1355, 4
    %v2134 = vrot.slane %v1431, 2
    %v2136 = vrot.slane %v1509, 2
    %v2138 = vrot.slane %v1739, 6
    %v2140 = vrot.slane %v1817, 6
    %v2142 = vrot.slane %v1893, 4
    %v2144 = vrot.slane %v1971, 4
    %v2146 = vrot.slane %v2047, 2
    %v2149 = vrot.slane %v2125, 2
    %vm2151 = vcmask 1040384
    %v2152 = vsel %vm2151, %v969, %v1047
    %vm2153 = vcmask 1041408
    %v2154 = vsel %vm2153, %v2152, %v2126
    %vm2155 = vcmask 1042432
    %v2156 = vsel %vm2155, %v2154, %v2128
    %vm2157 = vcmask 1043456
    %v2158 = vsel %vm2157, %v2156, %v2130
    %vm2159 = vcmask 1044480
    %v2160 = vsel %vm2159, %v2158, %v2132
    %vm2161 = vcmask 1045504
    %v2162 = vsel %vm2161, %v2160, %v2134
    %vm2163 = vcmask 1046528
    %v2164 = vsel %vm2163, %v2162, %v2136
    %v2165 = vsel %vm2151, %v1585, %v1663
    %v2166 = vsel %vm2153, %v2165, %v2138
    %v2167 = vsel %vm2155, %v2166, %v2140
    %v2168 = vsel %vm2157, %v2167, %v2142
    %v2169 = vsel %vm2159, %v2168, %v2144
    %v2170 = vsel %vm2161, %v2169, %v2146
    %v2171 = vsel %vm2163, %v2170, %v2149
    %v2172 = vld [vmem:[%s1 + $0x90] sm:$0xff]
    %v2173 = vld [vmem:[%s1 + $0x98] sm:$0xff]
    %v2174 = vld [vmem:[%s1 + $0xa0] sm:$0xff]
    %v2175 = vld [vmem:[%s1 + $0xa8] sm:$0xff]
    %v2176 = vld [vmem:[%s1 + $0xb0] sm:$0x1]
    %v2177 = vlaneseq
    %v2178 = vshrl.u32 %v2177, 7
    %v2179 = vsub.s32 0, %v2178
    %v2180 = vrot.slane %v2176, %v2179
    %v2182 = vsel %vm107, %v2164, 0
    %v2185 = vsel %vm107, %v2171, 0
    %2187 = vmatprep.subr.mxu0 0.0
    %2188 = vmatpush1.msra.mxu0 %v2172
    %2189 = vmatprep.subr.mxu0 0.0
    %2190 = vmatpush1.msra.mxu0 %v2173
    %2191 = vmatprep.subr.mxu0 0.0
    %2192 = vmatpush1.msra.mxu0 %v2174
    %2193 = vmatprep.subr.mxu0 0.0
    %2194 = vmatpush1.msra.mxu0 %v2175
    %2195 = vmatprep.subr.mxu0 0.0
    %2196 = vmatpush1.msra.mxu0 0.0
    %2197 = vmatprep.subr.mxu0 0.0
    %2198 = vmatpush1.msra.mxu0 0.0
    %2199 = vmatprep.subr.mxu0 0.0
    %2200 = vmatpush1.msra.mxu0 0.0
    %2201 = vmatprep.subr.mxu0 0.0
    %2202 = vmatpush1.msra.mxu0 0.0
    %2203 = vmatprep.subr.mxu0 0.0
    %2204 = vmatpush1.msra.mxu0 0.0
    %2205 = vmatprep.subr.mxu0 0.0
    %2206 = vmatpush1.msra.mxu0 0.0
    %2207 = vmatprep.subr.mxu0 0.0
    %2208 = vmatpush1.msra.mxu0 0.0
    %2209 = vmatprep.subr.mxu0 0.0
    %2210 = vmatpush1.msra.mxu0 0.0
    %2211 = vmatprep.subr.mxu0 0.0
    %2212 = vmatpush1.msra.mxu0 0.0
    %2213 = vmatprep.subr.mxu0 0.0
    %2214 = vmatpush1.msra.mxu0 0.0
    %2215 = vmatprep.subr.mxu0 0.0
    %2216 = vmatpush1.msra.mxu0 0.0
    %2217 = vmatprep.subr.mxu0 0.0
    %2218 = vmatpush1.msra.mxu0 0.0
    %2219 = vmatprep.subr.mxu0 0.0
    %2220 = vmatpush1.msra.mxu0 0.0
    %2221 = vmatprep.subr.mxu0 0.0
    %2222 = vmatpush1.msra.mxu0 0.0
    %2223 = vmatprep.subr.mxu0 0.0
    %2224 = vmatpush1.msra.mxu0 0.0
    %2225 = vmatprep.subr.mxu0 0.0
    %2226 = vmatpush1.msra.mxu0 0.0
    %2227 = vmatprep.subr.mxu0 0.0
    %2228 = vmatpush1.msra.mxu0 0.0
    %2229 = vmatprep.subr.mxu0 0.0
    %2230 = vmatpush1.msra.mxu0 0.0
    %2231 = vmatprep.subr.mxu0 0.0
    %2232 = vmatpush1.msra.mxu0 0.0
    %2233 = vmatprep.subr.mxu0 0.0
    %2234 = vmatpush1.msra.mxu0 0.0
    %2235 = vmatprep.subr.mxu0 0.0
    %2236 = vmatpush1.msra.mxu0 0.0
    %2237 = vmatprep.subr.mxu0 0.0
    %2238 = vmatpush1.msra.mxu0 0.0
    %2239 = vmatprep.subr.mxu0 0.0
    %2240 = vmatpush1.msra.mxu0 0.0
    %2241 = vmatprep.subr.mxu0 0.0
    %2242 = vmatpush1.msra.mxu0 0.0
    %2243 = vmatprep.subr.mxu0 0.0
    %2244 = vmatpush1.msra.mxu0 0.0
    %2245 = vmatprep.subr.mxu0 0.0
    %2246 = vmatpush1.msra.mxu0 0.0
    %2247 = vmatprep.subr.mxu0 0.0
    %2248 = vmatpush1.msra.mxu0 0.0
    %2249 = vmatprep.subr.mxu0 0.0
    %2250 = vmatpush1.msra.mxu0 0.0
    %2251 = vmatprep.mubr.f32.mxu0 0.0
    %2252 = vmatmul.mubr.f32.gmra.mrb[0].mxu0 %v2182
    %v2253 = vpop.f32.mrb[0].mxu0
    %v2254 = vadd.f32 %v2180, %v2253
    %v2255 = vpop.f32.mrb[0].mxu0
    %2256 = vmatprep.mubr.f32.mxu0 0.0
    %2257 = vmatmul.mubr.f32.gmra.mrb[0].mxu0 %v2185
    %v2258 = vpop.f32.mrb[0].mxu0
    %v2259 = vadd.f32 %v2180, %v2258
    %v2260 = vpop.f32.mrb[0].mxu0
    %2261 = vdwg.mxu0
    %2262 = vst.msk [vmem:[#allocation2] sm:$0xff] %vm21, %v2254
    %2263 = vst.msk [vmem:[#allocation2 + $0x8] sm:$0xff] %vm21, %v2259
    // Predicated region
    $region10: #{autoencoder_forward.1} parent=1 // pred_check
      _
    $region11: #{autoencoder_forward.1} parent=1 // pred_check_branch
      %2265 = sbr.rel (0) target = $region13
    $region12: #{autoencoder_forward.1} parent=1 // pred_region
      %s2267 = ssub.s32 256, 256
      %2268 = vsyncadd [#allocation3], %s2267
      %s2269 = sshll.u32 [#allocation2], 4
      %s2270 = int_to_ptr.vmem [resolvable:$true] %s2269
      %2275 = dma.vmem_to_hbm [thread:$0]  %s2270, 256, %s2, [#allocation3], 128, 128, 8
    $region13: #{autoencoder_forward.1} parent=1 // pred_fallthru
      _
    // Predicated region
    $region14: #{autoencoder_forward.1} parent=1 // pred_check
      _
    $region15: #{autoencoder_forward.1} parent=1 // pred_check_branch
      %2277 = sbr.rel (0) target = $region17
    $region16: #{autoencoder_forward.1} parent=1 // pred_region
      %2278 = dma.done [#allocation3], 256
    $region17: #{autoencoder_forward.1} parent=1 // pred_fallthru
      _
    %2279 = vsyncpa [#allocation3], 1

</llo_original>
